<compile_context>
chip_gen: v6e
topology: v6e:2x2x1
jax: 0.10.0
libtpu: 0.0.40
codegen_flags: <defaults>
</compile_context>

<pallas_src>
import jax
import jax.numpy as jnp
import numpy as np
from jax.experimental import pallas as pl
from jax.experimental.pallas import tpu as pltpu

# ---- small, module-consistent shapes ----------------------------------------
BATCH = 2            # batch of tokenized texts (single-text serving path; batch more
                     # texts per call whenever serving allows to amortize codebook DMA)
TEXT_DIM = 32        # text transformer dim (stand-in)
DIM_LATENT = 128     # MuLaN default dim_latent
NUM_QUANTIZERS = 4   # rq_num_quantizers (shrunk from 8 for the demo)
CODEBOOK_SIZE = 256  # codebook_size (shrunk from 1024 for the demo)
COND_DIM = 32        # conditioning dim of the default namespace ('semantic')


def _mulan_quantizer_kernel(x_ref, w_ref, b_ref, cbt_ref, csq_ref, fused_ref,
                            idx_ref, cond_out_ref, lat_ref):
    # ---- MuLaN.get_text_latents tail: text_to_latents Linear + l2norm -------
    x = x_ref[...]                                                    # (B, text_dim)
    lat = jnp.dot(x, w_ref[...], preferred_element_type=jnp.float32) + b_ref[...]
    norm = jnp.sqrt(jnp.sum(lat * lat, axis=-1, keepdims=True))
    lat = lat / jnp.maximum(norm, 1e-12)                              # F.normalize
    lat_ref[...] = lat

    # ---- ResidualVQ (eval-mode euclidean nearest neighbour) -----------------
    residual = lat                                                    # (B, D)
    B = residual.shape[0]
    Q = fused_ref.shape[0]
    C = fused_ref.shape[1]
    D = lat.shape[-1]
    lane_iota = jax.lax.broadcasted_iota(jnp.int32, (B, C), 1)

    idx_cols = []                                                     # accumulated in vregs
    cond_cols = []
    for q in range(Q):                                                # static unroll
        # argmin_c ||r - c||^2  ==  argmin_c (||c||^2 - 2 r.c)  (r_sq is constant in c)
        cross = jnp.dot(residual, cbt_ref[q],                         # (B, C), no transpose
                        preferred_element_type=jnp.float32)
        dist = csq_ref[q] - 2.0 * cross                               # argmin-equivalent only
        # argmin over codebook axis (manual min + iota select, ties -> lowest index)
        dmin = jnp.min(dist, axis=-1, keepdims=True)
        idx = jnp.min(jnp.where(dist == dmin, lane_iota, C), axis=-1)  # (B,)
        idx = jnp.minimum(idx, C - 1)                                  # NaN safety clamp
        idx_cols.append(idx[:, None].astype(jnp.int32))
        # one-hot -> fused [codebook || cond-embedding] gather, single MXU matmul
        onehot = (lane_iota == idx[:, None]).astype(jnp.float32)       # (B, C)
        gathered = jnp.dot(onehot, fused_ref[q],                       # (B, D + cond_dim)
                           preferred_element_type=jnp.float32)
        quantized = gathered[:, :D]
        cond_cols.append(gathered[:, D:])
        residual = residual - quantized

    # lane-dense, write-once outputs
    idx_ref[...] = jnp.concatenate(idx_cols, axis=1)                   # (B, Q) int32
    cond_out_ref[...] = jnp.concatenate(cond_cols, axis=1)             # (B, Q*cond_dim)


def musiclm_text_conditioning(text_embeds, w, b, codebooks, cond_embeddings):
    """Returns (rq_indices (B,Q) int32, cond_embeds (B,Q,cond_dim), text_latents (B,D))."""
    B, text_dim = text_embeds.shape
    Q, C, D = codebooks.shape
    cond_dim = cond_embeddings.shape[-1]

    # Constant precompute (hoisted out of the kernel; folded once under jit):
    cb_t = jnp.transpose(codebooks, (0, 2, 1))                        # (Q, D, C)
    c_sq = jnp.sum(codebooks * codebooks, axis=-1)[:, None, :]        # (Q, 1, C)
    fused = jnp.concatenate([codebooks, cond_embeddings], axis=-1)    # (Q, C, D+cond_dim)

    vmem = pl.BlockSpec(memory_space=pltpu.MemorySpace.VMEM)
    bytes_in = 4 * (B * text_dim + text_dim * D + D
                    + cb_t.size + c_sq.size + fused.size)
    bytes_out = 4 * (B * Q + B * Q * cond_dim + B * D)
    cost = pl.CostEstimate(
        flops=2 * B * (text_dim * D + Q * C * (2 * D + cond_dim)),
        transcendentals=0,
        bytes_accessed=bytes_in + bytes_out,
    )

    idx, cond_flat, lat = pl.pallas_call(
        _mulan_quantizer_kernel,
        out_shape=(
            jax.ShapeDtypeStruct((B, Q), jnp.int32),
            jax.ShapeDtypeStruct((B, Q * cond_dim), jnp.float32),
            jax.ShapeDtypeStruct((B, D), jnp.float32),
        ),
        in_specs=[vmem] * 6,
        out_specs=(vmem, vmem, vmem),
        compiler_params=pltpu.CompilerParams(vmem_limit_bytes=64 << 20),
        cost_estimate=cost,
    )(text_embeds, w, b, cb_t, c_sq, fused)

    return idx, cond_flat.reshape(B, Q, cond_dim), lat


# ---- pure-JAX reference for validation ---------------------------------------
def _reference(text_embeds, w, b, codebooks, cond_embeddings):
    lat = text_embeds @ w + b
    lat = lat / jnp.maximum(jnp.linalg.norm(lat, axis=-1, keepdims=True), 1e-12)
    residual = lat
    idxs, conds = [], []
    for q in range(codebooks.shape[0]):
        cb = codebooks[q]
        dist = (jnp.sum(residual**2, -1, keepdims=True)
                - 2.0 * residual @ cb.T + jnp.sum(cb**2, -1)[None, :])
        idx = jnp.argmin(dist, axis=-1)
        idxs.append(idx)
        conds.append(cond_embeddings[q][idx])
        residual = residual - cb[idx]
    return jnp.stack(idxs, 1), jnp.stack(conds, 1), lat


if __name__ == "__main__":
    key = jax.random.PRNGKey(0)
    k1, k2, k3, k4, k5 = jax.random.split(key, 5)

    # synthetic pooled text-transformer output (stand-in for TextTransformer + tokenizer)
    text_embeds = jax.random.normal(k1, (BATCH, TEXT_DIM), jnp.float32)

    # MuLaN.text_to_latents = nn.Linear(text_dim, dim_latent)
    w = jax.random.normal(k2, (TEXT_DIM, DIM_LATENT), jnp.float32) / np.sqrt(TEXT_DIM)
    b = jax.random.normal(k3, (1, DIM_LATENT), jnp.float32) * 0.01

    # ResidualVQ codebooks (eval-mode) and MuLaNEmbedQuantizer.cond_embeddings (std=0.02)
    codebooks = jax.random.normal(
        k4, (NUM_QUANTIZERS, CODEBOOK_SIZE, DIM_LATENT), jnp.float32)
    cond_embeddings = 0.02 * jax.random.normal(
        k5, (NUM_QUANTIZERS, CODEBOOK_SIZE, COND_DIM), jnp.float32)

    run = jax.jit(musiclm_text_conditioning)
    idx, cond_out, latents = jax.block_until_ready(
        run(text_embeds, w, b, codebooks, cond_embeddings))

    ref_idx, ref_cond, ref_lat = _reference(text_embeds, w, b, codebooks, cond_embeddings)
    np.testing.assert_array_equal(np.asarray(idx), np.asarray(ref_idx))
    np.testing.assert_allclose(np.asarray(latents), np.asarray(ref_lat),
                               rtol=1e-4, atol=1e-4)
    np.testing.assert_allclose(np.asarray(cond_out), np.asarray(ref_cond),
                               rtol=1e-3, atol=1e-4)
    assert idx.shape == (BATCH, NUM_QUANTIZERS)
    assert cond_out.shape == (BATCH, NUM_QUANTIZERS, COND_DIM)

    print("KERNEL_OK")
</pallas_src>

<mosaic_0001>
module attributes {stable_mosaic.version = 11 : i64} {
  func.func @_mulan_quantizer_kernel(%arg0: memref<2x32xf32, #tpu.memory_space<vmem>>, %arg1: memref<32x128xf32, #tpu.memory_space<vmem>>, %arg2: memref<1x128xf32, #tpu.memory_space<vmem>>, %arg3: memref<4x128x256xf32, #tpu.memory_space<vmem>>, %arg4: memref<4x1x256xf32, #tpu.memory_space<vmem>>, %arg5: memref<4x256x160xf32, #tpu.memory_space<vmem>>, %arg6: memref<2x4xi32, #tpu.memory_space<vmem>>, %arg7: memref<2x128xf32, #tpu.memory_space<vmem>>, %arg8: memref<2x128xf32, #tpu.memory_space<vmem>>) attributes {dimension_semantics = [], scalar_prefetch = 0 : i64, scratch_operands = 0 : i64, tpu.core_type = #tpu.core_type<tc>} {
    %c0 = arith.constant 0 : index
    %c0_0 = arith.constant 0 : index
    %0 = vector.load %arg0[%c0, %c0_0] : memref<2x32xf32, #tpu.memory_space<vmem>>, vector<2x32xf32>
    %c0_1 = arith.constant 0 : index
    %c0_2 = arith.constant 0 : index
    %1 = vector.load %arg1[%c0_1, %c0_2] : memref<32x128xf32, #tpu.memory_space<vmem>>, vector<32x128xf32>
    %cst = arith.constant dense<0.000000e+00> : vector<2x128xf32>
    %2 = tpu.matmul %0, %1, %cst {dimension_numbers = #tpu.dot_dimension_numbers<[1], [0], [0], [1], [0, 0, 1, 1], [], []>} : vector<2x32xf32>, vector<32x128xf32>, vector<2x128xf32> -> vector<2x128xf32>
    %c0_3 = arith.constant 0 : index
    %c0_4 = arith.constant 0 : index
    %3 = vector.load %arg2[%c0_3, %c0_4] : memref<1x128xf32, #tpu.memory_space<vmem>>, vector<1x128xf32>
    %4 = vector.broadcast %3 : vector<1x128xf32> to vector<2x128xf32>
    %5 = arith.addf %2, %4 : vector<2x128xf32>
    %6 = arith.mulf %5, %5 : vector<2x128xf32>
    %cst_5 = arith.constant dense<0.000000e+00> : vector<2xf32>
    %7 = vector.multi_reduction <add>, %6, %cst_5 [1] : vector<2x128xf32> to vector<2xf32>
    %8 = vector.shape_cast %7 : vector<2xf32> to vector<2x1xf32>
    %9 = math.sqrt %8 : vector<2x1xf32>
    %cst_6 = arith.constant 9.99999996E-13 : f32
    %10 = vector.broadcast %cst_6 : f32 to vector<2x1xf32>
    %11 = arith.maximumf %9, %10 : vector<2x1xf32>
    %12 = vector.broadcast %11 : vector<2x1xf32> to vector<2x128xf32>
    %13 = arith.divf %5, %12 : vector<2x128xf32>
    %c0_7 = arith.constant 0 : index
    %c0_8 = arith.constant 0 : index
    %14 = vector.load %arg8[%c0_7, %c0_8] : memref<2x128xf32, #tpu.memory_space<vmem>>, vector<2x128xf32>
    tpu.vector_store %arg8[%c0_7, %c0_8], %13 {strides = array<i32>} : memref<2x128xf32, #tpu.memory_space<vmem>>, vector<2x128xf32>,
    %15 = tpu.iota {dimensions = array<i32: 1>} : vector<2x256xi32>
    %c0_9 = arith.constant 0 : index
    %c0_10 = arith.constant 0 : index
    %c0_11 = arith.constant 0 : index
    %16 = vector.load %arg3[%c0_9, %c0_10, %c0_11] : memref<4x128x256xf32, #tpu.memory_space<vmem>>, vector<1x128x256xf32>
    %17 = vector.shape_cast %16 : vector<1x128x256xf32> to vector<128x256xf32>
    %cst_12 = arith.constant dense<0.000000e+00> : vector<2x256xf32>
    %18 = tpu.matmul %13, %17, %cst_12 {dimension_numbers = #tpu.dot_dimension_numbers<[1], [0], [0], [1], [0, 0, 1, 1], [], []>} : vector<2x128xf32>, vector<128x256xf32>, vector<2x256xf32> -> vector<2x256xf32>
    %c0_13 = arith.constant 0 : index
    %c0_14 = arith.constant 0 : index
    %c0_15 = arith.constant 0 : index
    %19 = vector.load %arg4[%c0_13, %c0_14, %c0_15] : memref<4x1x256xf32, #tpu.memory_space<vmem>>, vector<1x1x256xf32>
    %20 = vector.shape_cast %19 : vector<1x1x256xf32> to vector<1x256xf32>
    %cst_16 = arith.constant 2.000000e+00 : f32
    %21 = vector.broadcast %cst_16 : f32 to vector<2x256xf32>
    %22 = arith.mulf %21, %18 : vector<2x256xf32>
    %23 = vector.broadcast %20 : vector<1x256xf32> to vector<2x256xf32>
    %24 = arith.subf %23, %22 : vector<2x256xf32>
    %cst_17 = arith.constant dense<0x7F800000> : vector<2xf32>
    %25 = vector.multi_reduction <minimumf>, %24, %cst_17 [1] : vector<2x256xf32> to vector<2xf32>
    %26 = vector.shape_cast %25 : vector<2xf32> to vector<2x1xf32>
    %27 = vector.broadcast %26 : vector<2x1xf32> to vector<2x256xf32>
    %28 = arith.cmpf oeq, %24, %27 : vector<2x256xf32>
    %c256_i32 = arith.constant 256 : i32
    %29 = vector.broadcast %c256_i32 : i32 to vector<2x256xi32>
    %30 = arith.select %28, %15, %29 : vector<2x256xi1>, vector<2x256xi32>
    %cst_18 = arith.constant dense<2147483647> : vector<2xi32>
    %31 = vector.multi_reduction <minsi>, %30, %cst_18 [1] : vector<2x256xi32> to vector<2xi32>
    %c255_i32 = arith.constant 255 : i32
    %32 = vector.broadcast %c255_i32 : i32 to vector<2xi32>
    %33 = arith.minsi %31, %32 : vector<2xi32>
    %34 = vector.shape_cast %33 : vector<2xi32> to vector<2x1xi32>
    %35 = vector.shape_cast %33 : vector<2xi32> to vector<2x1xi32>
    %36 = vector.broadcast %35 : vector<2x1xi32> to vector<2x256xi32>
    %37 = arith.cmpi eq, %15, %36 : vector<2x256xi32>
    %38 = arith.extui %37 : vector<2x256xi1> to vector<2x256xi32>
    %39 = arith.sitofp %38 : vector<2x256xi32> to vector<2x256xf32>
    %c0_19 = arith.constant 0 : index
    %c0_20 = arith.constant 0 : index
    %c0_21 = arith.constant 0 : index
    %40 = vector.load %arg5[%c0_19, %c0_20, %c0_21] : memref<4x256x160xf32, #tpu.memory_space<vmem>>, vector<1x256x160xf32>
    %41 = vector.shape_cast %40 : vector<1x256x160xf32> to vector<256x160xf32>
    %cst_22 = arith.constant dense<0.000000e+00> : vector<2x160xf32>
    %42 = tpu.matmul %39, %41, %cst_22 {dimension_numbers = #tpu.dot_dimension_numbers<[1], [0], [0], [1], [0, 0, 1, 1], [], []>} : vector<2x256xf32>, vector<256x160xf32>, vector<2x160xf32> -> vector<2x160xf32>
    %43 = vector.extract_strided_slice %42 {offsets = [0, 0], sizes = [2, 128], strides = [1, 1]} : vector<2x160xf32> to vector<2x128xf32>
    %44 = vector.extract_strided_slice %42 {offsets = [0, 128], sizes = [2, 32], strides = [1, 1]} : vector<2x160xf32> to vector<2x32xf32>
    %45 = arith.subf %13, %43 : vector<2x128xf32>
    %c1 = arith.constant 1 : index
    %c0_23 = arith.constant 0 : index
    %c0_24 = arith.constant 0 : index
    %46 = vector.load %arg3[%c1, %c0_23, %c0_24] : memref<4x128x256xf32, #tpu.memory_space<vmem>>, vector<1x128x256xf32>
    %47 = vector.shape_cast %46 : vector<1x128x256xf32> to vector<128x256xf32>
    %cst_25 = arith.constant dense<0.000000e+00> : vector<2x256xf32>
    %48 = tpu.matmul %45, %47, %cst_25 {dimension_numbers = #tpu.dot_dimension_numbers<[1], [0], [0], [1], [0, 0, 1, 1], [], []>} : vector<2x128xf32>, vector<128x256xf32>, vector<2x256xf32> -> vector<2x256xf32>
    %c1_26 = arith.constant 1 : index
    %c0_27 = arith.constant 0 : index
    %c0_28 = arith.constant 0 : index
    %49 = vector.load %arg4[%c1_26, %c0_27, %c0_28] : memref<4x1x256xf32, #tpu.memory_space<vmem>>, vector<1x1x256xf32>
    %50 = vector.shape_cast %49 : vector<1x1x256xf32> to vector<1x256xf32>
    %cst_29 = arith.constant 2.000000e+00 : f32
    %51 = vector.broadcast %cst_29 : f32 to vector<2x256xf32>
    %52 = arith.mulf %51, %48 : vector<2x256xf32>
    %53 = vector.broadcast %50 : vector<1x256xf32> to vector<2x256xf32>
    %54 = arith.subf %53, %52 : vector<2x256xf32>
    %cst_30 = arith.constant dense<0x7F800000> : vector<2xf32>
    %55 = vector.multi_reduction <minimumf>, %54, %cst_30 [1] : vector<2x256xf32> to vector<2xf32>
    %56 = vector.shape_cast %55 : vector<2xf32> to vector<2x1xf32>
    %57 = vector.broadcast %56 : vector<2x1xf32> to vector<2x256xf32>
    %58 = arith.cmpf oeq, %54, %57 : vector<2x256xf32>
    %c256_i32_31 = arith.constant 256 : i32
    %59 = vector.broadcast %c256_i32_31 : i32 to vector<2x256xi32>
    %60 = arith.select %58, %15, %59 : vector<2x256xi1>, vector<2x256xi32>
    %cst_32 = arith.constant dense<2147483647> : vector<2xi32>
    %61 = vector.multi_reduction <minsi>, %60, %cst_32 [1] : vector<2x256xi32> to vector<2xi32>
    %c255_i32_33 = arith.constant 255 : i32
    %62 = vector.broadcast %c255_i32_33 : i32 to vector<2xi32>
    %63 = arith.minsi %61, %62 : vector<2xi32>
    %64 = vector.shape_cast %63 : vector<2xi32> to vector<2x1xi32>
    %65 = vector.shape_cast %63 : vector<2xi32> to vector<2x1xi32>
    %66 = vector.broadcast %65 : vector<2x1xi32> to vector<2x256xi32>
    %67 = arith.cmpi eq, %15, %66 : vector<2x256xi32>
    %68 = arith.extui %67 : vector<2x256xi1> to vector<2x256xi32>
    %69 = arith.sitofp %68 : vector<2x256xi32> to vector<2x256xf32>
    %c1_34 = arith.constant 1 : index
    %c0_35 = arith.constant 0 : index
    %c0_36 = arith.constant 0 : index
    %70 = vector.load %arg5[%c1_34, %c0_35, %c0_36] : memref<4x256x160xf32, #tpu.memory_space<vmem>>, vector<1x256x160xf32>
    %71 = vector.shape_cast %70 : vector<1x256x160xf32> to vector<256x160xf32>
    %cst_37 = arith.constant dense<0.000000e+00> : vector<2x160xf32>
    %72 = tpu.matmul %69, %71, %cst_37 {dimension_numbers = #tpu.dot_dimension_numbers<[1], [0], [0], [1], [0, 0, 1, 1], [], []>} : vector<2x256xf32>, vector<256x160xf32>, vector<2x160xf32> -> vector<2x160xf32>
    %73 = vector.extract_strided_slice %72 {offsets = [0, 0], sizes = [2, 128], strides = [1, 1]} : vector<2x160xf32> to vector<2x128xf32>
    %74 = vector.extract_strided_slice %72 {offsets = [0, 128], sizes = [2, 32], strides = [1, 1]} : vector<2x160xf32> to vector<2x32xf32>
    %75 = arith.subf %45, %73 : vector<2x128xf32>
    %c2 = arith.constant 2 : index
    %c0_38 = arith.constant 0 : index
    %c0_39 = arith.constant 0 : index
    %76 = vector.load %arg3[%c2, %c0_38, %c0_39] : memref<4x128x256xf32, #tpu.memory_space<vmem>>, vector<1x128x256xf32>
    %77 = vector.shape_cast %76 : vector<1x128x256xf32> to vector<128x256xf32>
    %cst_40 = arith.constant dense<0.000000e+00> : vector<2x256xf32>
    %78 = tpu.matmul %75, %77, %cst_40 {dimension_numbers = #tpu.dot_dimension_numbers<[1], [0], [0], [1], [0, 0, 1, 1], [], []>} : vector<2x128xf32>, vector<128x256xf32>, vector<2x256xf32> -> vector<2x256xf32>
    %c2_41 = arith.constant 2 : index
    %c0_42 = arith.constant 0 : index
    %c0_43 = arith.constant 0 : index
    %79 = vector.load %arg4[%c2_41, %c0_42, %c0_43] : memref<4x1x256xf32, #tpu.memory_space<vmem>>, vector<1x1x256xf32>
    %80 = vector.shape_cast %79 : vector<1x1x256xf32> to vector<1x256xf32>
    %cst_44 = arith.constant 2.000000e+00 : f32
    %81 = vector.broadcast %cst_44 : f32 to vector<2x256xf32>
    %82 = arith.mulf %81, %78 : vector<2x256xf32>
    %83 = vector.broadcast %80 : vector<1x256xf32> to vector<2x256xf32>
    %84 = arith.subf %83, %82 : vector<2x256xf32>
    %cst_45 = arith.constant dense<0x7F800000> : vector<2xf32>
    %85 = vector.multi_reduction <minimumf>, %84, %cst_45 [1] : vector<2x256xf32> to vector<2xf32>
    %86 = vector.shape_cast %85 : vector<2xf32> to vector<2x1xf32>
    %87 = vector.broadcast %86 : vector<2x1xf32> to vector<2x256xf32>
    %88 = arith.cmpf oeq, %84, %87 : vector<2x256xf32>
    %c256_i32_46 = arith.constant 256 : i32
    %89 = vector.broadcast %c256_i32_46 : i32 to vector<2x256xi32>
    %90 = arith.select %88, %15, %89 : vector<2x256xi1>, vector<2x256xi32>
    %cst_47 = arith.constant dense<2147483647> : vector<2xi32>
    %91 = vector.multi_reduction <minsi>, %90, %cst_47 [1] : vector<2x256xi32> to vector<2xi32>
    %c255_i32_48 = arith.constant 255 : i32
    %92 = vector.broadcast %c255_i32_48 : i32 to vector<2xi32>
    %93 = arith.minsi %91, %92 : vector<2xi32>
    %94 = vector.shape_cast %93 : vector<2xi32> to vector<2x1xi32>
    %95 = vector.shape_cast %93 : vector<2xi32> to vector<2x1xi32>
    %96 = vector.broadcast %95 : vector<2x1xi32> to vector<2x256xi32>
    %97 = arith.cmpi eq, %15, %96 : vector<2x256xi32>
    %98 = arith.extui %97 : vector<2x256xi1> to vector<2x256xi32>
    %99 = arith.sitofp %98 : vector<2x256xi32> to vector<2x256xf32>
    %c2_49 = arith.constant 2 : index
    %c0_50 = arith.constant 0 : index
    %c0_51 = arith.constant 0 : index
    %100 = vector.load %arg5[%c2_49, %c0_50, %c0_51] : memref<4x256x160xf32, #tpu.memory_space<vmem>>, vector<1x256x160xf32>
    %101 = vector.shape_cast %100 : vector<1x256x160xf32> to vector<256x160xf32>
    %cst_52 = arith.constant dense<0.000000e+00> : vector<2x160xf32>
    %102 = tpu.matmul %99, %101, %cst_52 {dimension_numbers = #tpu.dot_dimension_numbers<[1], [0], [0], [1], [0, 0, 1, 1], [], []>} : vector<2x256xf32>, vector<256x160xf32>, vector<2x160xf32> -> vector<2x160xf32>
    %103 = vector.extract_strided_slice %102 {offsets = [0, 0], sizes = [2, 128], strides = [1, 1]} : vector<2x160xf32> to vector<2x128xf32>
    %104 = vector.extract_strided_slice %102 {offsets = [0, 128], sizes = [2, 32], strides = [1, 1]} : vector<2x160xf32> to vector<2x32xf32>
    %105 = arith.subf %75, %103 : vector<2x128xf32>
    %c3 = arith.constant 3 : index
    %c0_53 = arith.constant 0 : index
    %c0_54 = arith.constant 0 : index
    %106 = vector.load %arg3[%c3, %c0_53, %c0_54] : memref<4x128x256xf32, #tpu.memory_space<vmem>>, vector<1x128x256xf32>
    %107 = vector.shape_cast %106 : vector<1x128x256xf32> to vector<128x256xf32>
    %cst_55 = arith.constant dense<0.000000e+00> : vector<2x256xf32>
    %108 = tpu.matmul %105, %107, %cst_55 {dimension_numbers = #tpu.dot_dimension_numbers<[1], [0], [0], [1], [0, 0, 1, 1], [], []>} : vector<2x128xf32>, vector<128x256xf32>, vector<2x256xf32> -> vector<2x256xf32>
    %c3_56 = arith.constant 3 : index
    %c0_57 = arith.constant 0 : index
    %c0_58 = arith.constant 0 : index
    %109 = vector.load %arg4[%c3_56, %c0_57, %c0_58] : memref<4x1x256xf32, #tpu.memory_space<vmem>>, vector<1x1x256xf32>
    %110 = vector.shape_cast %109 : vector<1x1x256xf32> to vector<1x256xf32>
    %cst_59 = arith.constant 2.000000e+00 : f32
    %111 = vector.broadcast %cst_59 : f32 to vector<2x256xf32>
    %112 = arith.mulf %111, %108 : vector<2x256xf32>
    %113 = vector.broadcast %110 : vector<1x256xf32> to vector<2x256xf32>
    %114 = arith.subf %113, %112 : vector<2x256xf32>
    %cst_60 = arith.constant dense<0x7F800000> : vector<2xf32>
    %115 = vector.multi_reduction <minimumf>, %114, %cst_60 [1] : vector<2x256xf32> to vector<2xf32>
    %116 = vector.shape_cast %115 : vector<2xf32> to vector<2x1xf32>
    %117 = vector.broadcast %116 : vector<2x1xf32> to vector<2x256xf32>
    %118 = arith.cmpf oeq, %114, %117 : vector<2x256xf32>
    %c256_i32_61 = arith.constant 256 : i32
    %119 = vector.broadcast %c256_i32_61 : i32 to vector<2x256xi32>
    %120 = arith.select %118, %15, %119 : vector<2x256xi1>, vector<2x256xi32>
    %cst_62 = arith.constant dense<2147483647> : vector<2xi32>
    %121 = vector.multi_reduction <minsi>, %120, %cst_62 [1] : vector<2x256xi32> to vector<2xi32>
    %c255_i32_63 = arith.constant 255 : i32
    %122 = vector.broadcast %c255_i32_63 : i32 to vector<2xi32>
    %123 = arith.minsi %121, %122 : vector<2xi32>
    %124 = vector.shape_cast %123 : vector<2xi32> to vector<2x1xi32>
    %125 = vector.shape_cast %123 : vector<2xi32> to vector<2x1xi32>
    %126 = vector.broadcast %125 : vector<2x1xi32> to vector<2x256xi32>
    %127 = arith.cmpi eq, %15, %126 : vector<2x256xi32>
    %128 = arith.extui %127 : vector<2x256xi1> to vector<2x256xi32>
    %129 = arith.sitofp %128 : vector<2x256xi32> to vector<2x256xf32>
    %c3_64 = arith.constant 3 : index
    %c0_65 = arith.constant 0 : index
    %c0_66 = arith.constant 0 : index
    %130 = vector.load %arg5[%c3_64, %c0_65, %c0_66] : memref<4x256x160xf32, #tpu.memory_space<vmem>>, vector<1x256x160xf32>
    %131 = vector.shape_cast %130 : vector<1x256x160xf32> to vector<256x160xf32>
    %cst_67 = arith.constant dense<0.000000e+00> : vector<2x160xf32>
    %132 = tpu.matmul %129, %131, %cst_67 {dimension_numbers = #tpu.dot_dimension_numbers<[1], [0], [0], [1], [0, 0, 1, 1], [], []>} : vector<2x256xf32>, vector<256x160xf32>, vector<2x160xf32> -> vector<2x160xf32>
    %133 = vector.extract_strided_slice %132 {offsets = [0, 128], sizes = [2, 32], strides = [1, 1]} : vector<2x160xf32> to vector<2x32xf32>
    %134 = tpu.concatenate %34, %64, %94, %124 in 1 : vector<2x1xi32>, vector<2x1xi32>, vector<2x1xi32>, vector<2x1xi32> -> vector<2x4xi32>
    %c0_68 = arith.constant 0 : index
    %c0_69 = arith.constant 0 : index
    %135 = vector.load %arg6[%c0_68, %c0_69] : memref<2x4xi32, #tpu.memory_space<vmem>>, vector<2x4xi32>
    tpu.vector_store %arg6[%c0_68, %c0_69], %134 {strides = array<i32>} : memref<2x4xi32, #tpu.memory_space<vmem>>, vector<2x4xi32>,
    %136 = tpu.concatenate %44, %74, %104, %133 in 1 : vector<2x32xf32>, vector<2x32xf32>, vector<2x32xf32>, vector<2x32xf32> -> vector<2x128xf32>
    %c0_70 = arith.constant 0 : index
    %c0_71 = arith.constant 0 : index
    %137 = vector.load %arg7[%c0_70, %c0_71] : memref<2x128xf32, #tpu.memory_space<vmem>>, vector<2x128xf32>
    tpu.vector_store %arg7[%c0_70, %c0_71], %136 {strides = array<i32>} : memref<2x128xf32, #tpu.memory_space<vmem>>, vector<2x128xf32>,
    return
  }
}

</mosaic_0001>

<llo_original>
// kernel: musiclm_text_conditioning.1
$region0: #{musiclm_text_conditioning.1}
  #allocation0 [shape = 'u32[]', space=smem, size = 0x4, offset = 0x4, fixed_abs, tag = 'smem constant byte address 0x4 - core index']
  #allocation1 [shape = 'u32[144,128]{1,0:T(1,128)}', space=vmem, size = 0x12000, scoped, tag = 'internal scratch']
  %s0 = inlined_call_operand.vmem [shape: f32[2,32], index: 0, kind: input, shape index: {}]
  %s1 = inlined_call_operand.vmem [shape: f32[32,128], index: 1, kind: input, shape index: {}]
  %s2 = inlined_call_operand.vmem [shape: f32[1,128], index: 2, kind: input, shape index: {}]
  %s3 = inlined_call_operand.vmem [shape: f32[4,128,256], index: 3, kind: input, shape index: {}]
  %s4 = inlined_call_operand.vmem [shape: f32[4,1,256], index: 4, kind: input, shape index: {}]
  %s5 = inlined_call_operand.vmem [shape: f32[4,256,160], index: 5, kind: input, shape index: {}]
  %s6 = inlined_call_operand.hbm [shape: s32[2,4], index: 6, kind: output, shape index: {0}]
  %s7 = inlined_call_operand.vmem [shape: f32[2,128], index: 7, kind: output, shape index: {1}]
  %s8 = inlined_call_operand.hbm [shape: f32[2,128], index: 8, kind: output, shape index: {2}]
  %9 = xla_tuple %s6, %s7, %s8
  %s10 = sld [smem:[#allocation0]]
  $region50: #{musiclm_text_conditioning.1} parent=0
    _
  %s12 = ssub.s32 1, %s10
  %s13 = scalar_select 0, %s12, %s10
  $region1: #{musiclm_text_conditioning.1} parent=0
    #allocation2 [shape = 'u8[1024]{0}', space=vmem, size = 0x400, scoped, tag = 'output window, operand 0, single buffered']
    #allocation3 [shape = 's32[1]{0}', space=sflag, size = 0x4, scoped, tag = 'scoped memory for musiclm_text_conditioning.1']
    #allocation4 [shape = 'u8[1024]{0}', space=vmem, size = 0x400, scoped, tag = 'output window, operand 2, single buffered']
    #allocation5 [shape = 's32[1]{0}', space=sflag, size = 0x4, scoped, tag = 'scoped memory for musiclm_text_conditioning.1']
    %14 = vsyncpa [#allocation3], 0
    %15 = vsyncpa [#allocation5], 0
    // Predicated region
    $region2: #{musiclm_text_conditioning.1} parent=1 // pred_check
      _
    $region3: #{musiclm_text_conditioning.1} parent=1 // pred_check_branch
      %17 = sbr.rel (0) target = $region5
    $region4: #{musiclm_text_conditioning.1} parent=1 // pred_region
      _
    $region5: #{musiclm_text_conditioning.1} parent=1 // pred_fallthru
      _
    // Predicated region
    $region6: #{musiclm_text_conditioning.1} parent=1 // pred_check
      _
    $region7: #{musiclm_text_conditioning.1} parent=1 // pred_check_branch
      %19 = sbr.rel (0) target = $region9
    $region8: #{musiclm_text_conditioning.1} parent=1 // pred_region
      _
    $region9: #{musiclm_text_conditioning.1} parent=1 // pred_fallthru
      _
    // Predicated region
    $region10: #{musiclm_text_conditioning.1} parent=1 // pred_check
      _
    $region11: #{musiclm_text_conditioning.1} parent=1 // pred_check_branch
      %21 = sbr.rel (0) target = $region13
    $region12: #{musiclm_text_conditioning.1} parent=1 // pred_region
      _
    $region13: #{musiclm_text_conditioning.1} parent=1 // pred_fallthru
      _
    // Predicated region
    $region14: #{musiclm_text_conditioning.1} parent=1 // pred_check
      _
    $region15: #{musiclm_text_conditioning.1} parent=1 // pred_check_branch
      %23 = sbr.rel (0) target = $region17
    $region16: #{musiclm_text_conditioning.1} parent=1 // pred_region
      _
    $region17: #{musiclm_text_conditioning.1} parent=1 // pred_fallthru
      _
    // Predicated region
    $region18: #{musiclm_text_conditioning.1} parent=1 // pred_check
      _
    $region19: #{musiclm_text_conditioning.1} parent=1 // pred_check_branch
      %25 = sbr.rel (0) target = $region21
    $region20: #{musiclm_text_conditioning.1} parent=1 // pred_region
      _
    $region21: #{musiclm_text_conditioning.1} parent=1 // pred_fallthru
      _
    // Predicated region
    $region22: #{musiclm_text_conditioning.1} parent=1 // pred_check
      _
    $region23: #{musiclm_text_conditioning.1} parent=1 // pred_check_branch
      %27 = sbr.rel (0) target = $region25
    $region24: #{musiclm_text_conditioning.1} parent=1 // pred_region
      _
    $region25: #{musiclm_text_conditioning.1} parent=1 // pred_fallthru
      _
    %v28 = vld [vmem:[%s0] sm:$0x3]
    %v29 = vld [vmem:[%s1] sm:$0xff]
    %v30 = vld [vmem:[%s1 + $0x8] sm:$0xff]
    %v31 = vld [vmem:[%s1 + $0x10] sm:$0xff]
    %v32 = vld [vmem:[%s1 + $0x18] sm:$0xff]
    %v33 = vld [vmem:[%s2] sm:$0x1]
    %v35 = vlaneseq
    %v36 = vshrl.u32 %v35, 7
    %v37 = vsub.s32 0, %v36
    %v38 = vrot.slane %v33, %v37
    %vm40 = vcmask 261120
    %v42 = vsel %vm40, %v28, 0
    %44 = vmatprep.subr.mxu0 0.0
    %45 = vmatpush1.msra.mxu0 0.0
    %46 = vmatprep.subr.mxu0 0.0
    %47 = vmatpush1.msra.mxu0 0.0
    %48 = vmatprep.subr.mxu0 0.0
    %49 = vmatpush1.msra.mxu0 0.0
    %50 = vmatprep.subr.mxu0 0.0
    %51 = vmatpush1.msra.mxu0 0.0
    %52 = vmatprep.subr.mxu0 0.0
    %53 = vmatpush1.msra.mxu0 0.0
    %54 = vmatprep.subr.mxu0 0.0
    %55 = vmatpush1.msra.mxu0 0.0
    %56 = vmatprep.subr.mxu0 0.0
    %57 = vmatpush1.msra.mxu0 0.0
    %58 = vmatprep.subr.mxu0 0.0
    %59 = vmatpush1.msra.mxu0 0.0
    %60 = vmatprep.subr.mxu0 0.0
    %61 = vmatpush1.msra.mxu0 0.0
    %62 = vmatprep.subr.mxu0 0.0
    %63 = vmatpush1.msra.mxu0 0.0
    %64 = vmatprep.subr.mxu0 0.0
    %65 = vmatpush1.msra.mxu0 0.0
    %66 = vmatprep.subr.mxu0 0.0
    %67 = vmatpush1.msra.mxu0 0.0
    %68 = vmatprep.subr.mxu0 0.0
    %69 = vmatpush1.msra.mxu0 %v32
    %70 = vmatprep.subr.mxu0 0.0
    %71 = vmatpush1.msra.mxu0 %v31
    %72 = vmatprep.subr.mxu0 0.0
    %73 = vmatpush1.msra.mxu0 %v30
    %74 = vmatprep.subr.mxu0 0.0
    %75 = vmatpush1.msra.mxu0 %v29
    %76 = vmatprep.subr.mxu0 0.0
    %77 = vmatpush2.msra.mxu0 0.0
    %78 = vmatprep.subr.mxu0 0.0
    %79 = vmatpush2.msra.mxu0 0.0
    %80 = vmatprep.subr.mxu0 0.0
    %81 = vmatpush2.msra.mxu0 0.0
    %82 = vmatprep.subr.mxu0 0.0
    %83 = vmatpush2.msra.mxu0 0.0
    %84 = vmatprep.subr.mxu0 0.0
    %85 = vmatpush2.msra.mxu0 0.0
    %86 = vmatprep.subr.mxu0 0.0
    %87 = vmatpush2.msra.mxu0 0.0
    %88 = vmatprep.subr.mxu0 0.0
    %89 = vmatpush2.msra.mxu0 0.0
    %90 = vmatprep.subr.mxu0 0.0
    %91 = vmatpush2.msra.mxu0 0.0
    %92 = vmatprep.subr.mxu0 0.0
    %93 = vmatpush2.msra.mxu0 0.0
    %94 = vmatprep.subr.mxu0 0.0
    %95 = vmatpush2.msra.mxu0 0.0
    %96 = vmatprep.subr.mxu0 0.0
    %97 = vmatpush2.msra.mxu0 0.0
    %98 = vmatprep.subr.mxu0 0.0
    %99 = vmatpush2.msra.mxu0 0.0
    %100 = vmatprep.subr.mxu0 0.0
    %101 = vmatpush2.msra.mxu0 0.0
    %102 = vmatprep.subr.mxu0 0.0
    %103 = vmatpush2.msra.mxu0 0.0
    %104 = vmatprep.subr.mxu0 0.0
    %105 = vmatpush2.msra.mxu0 0.0
    %106 = vmatprep.subr.mxu0 0.0
    %107 = vmatpush2.msra.mxu0 0.0
    %108 = vmatprep.mubr.f32.mxu0 0.0
    %109 = vmatmul.mubr.f32.gmra.mxu0 %v42
    %v110 = vpop.f32.mrf.mxu0
    %v111 = vadd.f32 %v38, %v110
    %v112 = vpop.f32.mrf.mxu0
    %113 = vdwg.mxu0
    %v114 = vmul.f32 %v111, %v111
    %vm115 = vcmask 1041408
    %v116 = vsel %vm115, %v114, 0.0
    %117 = vadd.xlane.f32.xlu0 %v116
    %v118 = vpop.xlane.xlu0 %117
    %v119 = vrsqrt.pop %v118
    %v120 = vmul.f32 %v118, %v119
    %vm121 = vcmp.eq.f32.partialorder %v118, inf
    %v122 = vsel %vm121, %v118, %v120
    %vm123 = vcmp.eq.f32.partialorder %v118, 0.0
    %v124 = vand.u32 %v118, 2147483648
    %v125 = vsel %vm123, %v124, %v122
    %v126 = vmax.f32 %v125, 1e-12
    %v127 = vrcp.pop %v126
    %v128 = vmul.f32 %v111, %v127
    %129 = vst [vmem:[#allocation4] sm:$0x3] %v128
    %v130 = vlaneseq
    %v131 = vand.u32 %v130, 127
    %v132 = vadd.s32 %v131, 128
    %v133 = vld [vmem:[%s3] sm:$0xff]
    %v134 = vld [vmem:[%s3 + $0x8] sm:$0xff]
    %v135 = vld [vmem:[%s3 + $0x10] sm:$0xff]
    %v136 = vld [vmem:[%s3 + $0x18] sm:$0xff]
    %v137 = vld [vmem:[%s3 + $0x20] sm:$0xff]
    %v138 = vld [vmem:[%s3 + $0x28] sm:$0xff]
    %v139 = vld [vmem:[%s3 + $0x30] sm:$0xff]
    %v140 = vld [vmem:[%s3 + $0x38] sm:$0xff]
    %v141 = vld [vmem:[%s3 + $0x40] sm:$0xff]
    %v142 = vld [vmem:[%s3 + $0x48] sm:$0xff]
    %v143 = vld [vmem:[%s3 + $0x50] sm:$0xff]
    %v144 = vld [vmem:[%s3 + $0x58] sm:$0xff]
    %v145 = vld [vmem:[%s3 + $0x60] sm:$0xff]
    %v146 = vld [vmem:[%s3 + $0x68] sm:$0xff]
    %v147 = vld [vmem:[%s3 + $0x70] sm:$0xff]
    %v148 = vld [vmem:[%s3 + $0x78] sm:$0xff]
    %v149 = vld [vmem:[%s3 + $0x80] sm:$0xff]
    %v150 = vld [vmem:[%s3 + $0x88] sm:$0xff]
    %v151 = vld [vmem:[%s3 + $0x90] sm:$0xff]
    %v152 = vld [vmem:[%s3 + $0x98] sm:$0xff]
    %v153 = vld [vmem:[%s3 + $0xa0] sm:$0xff]
    %v154 = vld [vmem:[%s3 + $0xa8] sm:$0xff]
    %v155 = vld [vmem:[%s3 + $0xb0] sm:$0xff]
    %v156 = vld [vmem:[%s3 + $0xb8] sm:$0xff]
    %v157 = vld [vmem:[%s3 + $0xc0] sm:$0xff]
    %v158 = vld [vmem:[%s3 + $0xc8] sm:$0xff]
    %v159 = vld [vmem:[%s3 + $0xd0] sm:$0xff]
    %v160 = vld [vmem:[%s3 + $0xd8] sm:$0xff]
    %v161 = vld [vmem:[%s3 + $0xe0] sm:$0xff]
    %v162 = vld [vmem:[%s3 + $0xe8] sm:$0xff]
    %v163 = vld [vmem:[%s3 + $0xf0] sm:$0xff]
    %v164 = vld [vmem:[%s3 + $0xf8] sm:$0xff]
    %165 = vmatprep.subr.mxu0 %v164
    %166 = vmatpush1.msra.mxu0 %v163
    %167 = vmatprep.subr.mxu0 %v162
    %168 = vmatpush1.msra.mxu0 %v161
    %169 = vmatprep.subr.mxu0 %v160
    %170 = vmatpush1.msra.mxu0 %v159
    %171 = vmatprep.subr.mxu0 %v158
    %172 = vmatpush1.msra.mxu0 %v157
    %173 = vmatprep.subr.mxu0 %v156
    %174 = vmatpush1.msra.mxu0 %v155
    %175 = vmatprep.subr.mxu0 %v154
    %176 = vmatpush1.msra.mxu0 %v153
    %177 = vmatprep.subr.mxu0 %v152
    %178 = vmatpush1.msra.mxu0 %v151
    %179 = vmatprep.subr.mxu0 %v150
    %180 = vmatpush1.msra.mxu0 %v149
    %181 = vmatprep.subr.mxu0 %v148
    %182 = vmatpush1.msra.mxu0 %v147
    %183 = vmatprep.subr.mxu0 %v146
    %184 = vmatpush1.msra.mxu0 %v145
    %185 = vmatprep.subr.mxu0 %v144
    %186 = vmatpush1.msra.mxu0 %v143
    %187 = vmatprep.subr.mxu0 %v142
    %188 = vmatpush1.msra.mxu0 %v141
    %189 = vmatprep.subr.mxu0 %v140
    %190 = vmatpush1.msra.mxu0 %v139
    %191 = vmatprep.subr.mxu0 %v138
    %192 = vmatpush1.msra.mxu0 %v137
    %193 = vmatprep.subr.mxu0 %v136
    %194 = vmatpush1.msra.mxu0 %v135
    %195 = vmatprep.subr.mxu0 %v134
    %196 = vmatpush1.msra.mxu0 %v133
    %197 = vmatprep.subr.mxu0 0.0
    %198 = vmatpush2.msra.mxu0 0.0
    %199 = vmatprep.subr.mxu0 0.0
    %200 = vmatpush2.msra.mxu0 0.0
    %201 = vmatprep.subr.mxu0 0.0
    %202 = vmatpush2.msra.mxu0 0.0
    %203 = vmatprep.subr.mxu0 0.0
    %204 = vmatpush2.msra.mxu0 0.0
    %205 = vmatprep.subr.mxu0 0.0
    %206 = vmatpush2.msra.mxu0 0.0
    %207 = vmatprep.subr.mxu0 0.0
    %208 = vmatpush2.msra.mxu0 0.0
    %209 = vmatprep.subr.mxu0 0.0
    %210 = vmatpush2.msra.mxu0 0.0
    %211 = vmatprep.subr.mxu0 0.0
    %212 = vmatpush2.msra.mxu0 0.0
    %213 = vmatprep.subr.mxu0 0.0
    %214 = vmatpush2.msra.mxu0 0.0
    %215 = vmatprep.subr.mxu0 0.0
    %216 = vmatpush2.msra.mxu0 0.0
    %217 = vmatprep.subr.mxu0 0.0
    %218 = vmatpush2.msra.mxu0 0.0
    %219 = vmatprep.subr.mxu0 0.0
    %220 = vmatpush2.msra.mxu0 0.0
    %221 = vmatprep.subr.mxu0 0.0
    %222 = vmatpush2.msra.mxu0 0.0
    %223 = vmatprep.subr.mxu0 0.0
    %224 = vmatpush2.msra.mxu0 0.0
    %225 = vmatprep.subr.mxu0 0.0
    %226 = vmatpush2.msra.mxu0 0.0
    %227 = vmatprep.subr.mxu0 0.0
    %228 = vmatpush2.msra.mxu0 0.0
    %229 = vmatprep.mubr.f32.mxu0 0.0
    %230 = vmatmul.mubr.f32.gmra.mxu0 %v128
    %v231 = vpop.f32.mrf.mxu0
    %v232 = vadd.f32 0.0, %v231
    %v233 = vpop.f32.mrf.mxu0
    %v234 = vadd.f32 0.0, %v233
    %235 = vdwg.mxu0
    %v236 = vld [vmem:[%s4] sm:$0x3]
    %v237 = vmul.f32 %v232, 2.0
    %v238 = vmul.f32 %v234, 2.0
    %v240 = vlaneseq
    %v241 = vshrl.u32 %v240, 7
    %v242 = vsub.s32 0, %v241
    %v243 = vrot.slane %v236, %v242
    %v244 = vlaneseq
    %v245 = vshrl.u32 %v244, 7
    %v246 = vsub.s32 1, %v245
    %v247 = vrot.slane %v236, %v246
    %v250 = vsub.f32 %v243, %v237
    %v251 = vsub.f32 %v247, %v238
    %v252 = vsel %vm115, %v250, inf
    %v253 = vsel %vm115, %v251, inf
    %v254 = vmin.f32 %v252, %v253
    %255 = vmin.xlane.f32.xlu0 %v254
    %v256 = vpop.xlane.xlu0 %255
    %vm257 = vcmp.eq.f32.partialorder %v250, %v256
    %vm258 = vcmp.eq.f32.partialorder %v251, %v256
    %v259 = vsel %vm257, %v131, 256
    %v260 = vsel %vm258, %v132, 256
    %v261 = vsel %vm115, %v259, 2147483647
    %v262 = vsel %vm115, %v260, 2147483647
    %vm263 = vcmp.lt.s32.totalorder %v261, %v262
    %v264 = vsel %vm263, %v261, %v262
    %v265 = vand.u32 %v264, 65535
    %v266 = vshra.s32 %v264, 16
    %v267 = vcvt.s32.f32 %v265
    %v268 = vcvt.s32.f32 %v266
    %269 = vmin.xlane.f32.xlu0 %v268
    %v270 = vpop.xlane.xlu0 %269
    %vm271 = vcmp.eq.f32.partialorder %v268, %v270
    %v272 = vsel %vm271, %v267, inf
    %273 = vmin.xlane.f32.xlu0 %v272
    %v274 = vpop.xlane.xlu0 %273
    %v275 = vcvt.f32.s32 %v274
    %v276 = vcvt.f32.s32 %v270
    %v277 = vshll.u32 %v276, 16
    %v278 = vadd.s32 %v277, %v275
    %vm279 = vcmp.lt.s32.totalorder %v278, 255
    %v280 = vsel %vm279, %v278, 255
    %vm281 = vcmp.eq.s32.totalorder %v131, %v280
    %vm282 = vcmp.eq.s32.totalorder %v132, %v280
    %v283 = vsel %vm281, 1, 0
    %v284 = vsel %vm282, 1, 0
    %v285 = vcvt.s32.f32 %v283
    %v286 = vcvt.s32.f32 %v284
    %v287 = vld [vmem:[%s5] sm:$0xff]
    %v288 = vld [vmem:[%s5 + $0x8] sm:$0xff]
    %v289 = vld [vmem:[%s5 + $0x10] sm:$0xff]
    %v290 = vld [vmem:[%s5 + $0x18] sm:$0xff]
    %v291 = vld [vmem:[%s5 + $0x20] sm:$0xff]
    %v292 = vld [vmem:[%s5 + $0x28] sm:$0xff]
    %v293 = vld [vmem:[%s5 + $0x30] sm:$0xff]
    %v294 = vld [vmem:[%s5 + $0x38] sm:$0xff]
    %v295 = vld [vmem:[%s5 + $0x40] sm:$0xff]
    %v296 = vld [vmem:[%s5 + $0x48] sm:$0xff]
    %v297 = vld [vmem:[%s5 + $0x50] sm:$0xff]
    %v298 = vld [vmem:[%s5 + $0x58] sm:$0xff]
    %v299 = vld [vmem:[%s5 + $0x60] sm:$0xff]
    %v300 = vld [vmem:[%s5 + $0x68] sm:$0xff]
    %v301 = vld [vmem:[%s5 + $0x70] sm:$0xff]
    %v302 = vld [vmem:[%s5 + $0x78] sm:$0xff]
    %v303 = vld [vmem:[%s5 + $0x80] sm:$0xff]
    %v304 = vld [vmem:[%s5 + $0x88] sm:$0xff]
    %v305 = vld [vmem:[%s5 + $0x90] sm:$0xff]
    %v306 = vld [vmem:[%s5 + $0x98] sm:$0xff]
    %v307 = vld [vmem:[%s5 + $0xa0] sm:$0xff]
    %v308 = vld [vmem:[%s5 + $0xa8] sm:$0xff]
    %v309 = vld [vmem:[%s5 + $0xb0] sm:$0xff]
    %v310 = vld [vmem:[%s5 + $0xb8] sm:$0xff]
    %v311 = vld [vmem:[%s5 + $0xc0] sm:$0xff]
    %v312 = vld [vmem:[%s5 + $0xc8] sm:$0xff]
    %v313 = vld [vmem:[%s5 + $0xd0] sm:$0xff]
    %v314 = vld [vmem:[%s5 + $0xd8] sm:$0xff]
    %v315 = vld [vmem:[%s5 + $0xe0] sm:$0xff]
    %v316 = vld [vmem:[%s5 + $0xe8] sm:$0xff]
    %v317 = vld [vmem:[%s5 + $0xf0] sm:$0xff]
    %v318 = vld [vmem:[%s5 + $0xf8] sm:$0xff]
    %v319 = vld [vmem:[%s5 + $0x100] sm:$0xff]
    %v320 = vld [vmem:[%s5 + $0x108] sm:$0xff]
    %v321 = vld [vmem:[%s5 + $0x110] sm:$0xff]
    %v322 = vld [vmem:[%s5 + $0x118] sm:$0xff]
    %v323 = vld [vmem:[%s5 + $0x120] sm:$0xff]
    %v324 = vld [vmem:[%s5 + $0x128] sm:$0xff]
    %v325 = vld [vmem:[%s5 + $0x130] sm:$0xff]
    %v326 = vld [vmem:[%s5 + $0x138] sm:$0xff]
    %v327 = vld [vmem:[%s5 + $0x140] sm:$0xff]
    %v328 = vld [vmem:[%s5 + $0x148] sm:$0xff]
    %v329 = vld [vmem:[%s5 + $0x150] sm:$0xff]
    %v330 = vld [vmem:[%s5 + $0x158] sm:$0xff]
    %v331 = vld [vmem:[%s5 + $0x160] sm:$0xff]
    %v332 = vld [vmem:[%s5 + $0x168] sm:$0xff]
    %v333 = vld [vmem:[%s5 + $0x170] sm:$0xff]
    %v334 = vld [vmem:[%s5 + $0x178] sm:$0xff]
    %v335 = vld [vmem:[%s5 + $0x180] sm:$0xff]
    %v336 = vld [vmem:[%s5 + $0x188] sm:$0xff]
    %v337 = vld [vmem:[%s5 + $0x190] sm:$0xff]
    %v338 = vld [vmem:[%s5 + $0x198] sm:$0xff]
    %v339 = vld [vmem:[%s5 + $0x1a0] sm:$0xff]
    %v340 = vld [vmem:[%s5 + $0x1a8] sm:$0xff]
    %v341 = vld [vmem:[%s5 + $0x1b0] sm:$0xff]
    %v342 = vld [vmem:[%s5 + $0x1b8] sm:$0xff]
    %v343 = vld [vmem:[%s5 + $0x1c0] sm:$0xff]
    %v344 = vld [vmem:[%s5 + $0x1c8] sm:$0xff]
    %v345 = vld [vmem:[%s5 + $0x1d0] sm:$0xff]
    %v346 = vld [vmem:[%s5 + $0x1d8] sm:$0xff]
    %v347 = vld [vmem:[%s5 + $0x1e0] sm:$0xff]
    %v348 = vld [vmem:[%s5 + $0x1e8] sm:$0xff]
    %v349 = vld [vmem:[%s5 + $0x1f0] sm:$0xff]
    %v350 = vld [vmem:[%s5 + $0x1f8] sm:$0xff]
    %351 = vmatprep.subr.mxu0 %v318
    %352 = vmatpush1.msra.mxu0 %v317
    %353 = vmatprep.subr.mxu0 %v316
    %354 = vmatpush1.msra.mxu0 %v315
    %355 = vmatprep.subr.mxu0 %v314
    %356 = vmatpush1.msra.mxu0 %v313
    %357 = vmatprep.subr.mxu0 %v312
    %358 = vmatpush1.msra.mxu0 %v311
    %359 = vmatprep.subr.mxu0 %v310
    %360 = vmatpush1.msra.mxu0 %v309
    %361 = vmatprep.subr.mxu0 %v308
    %362 = vmatpush1.msra.mxu0 %v307
    %363 = vmatprep.subr.mxu0 %v306
    %364 = vmatpush1.msra.mxu0 %v305
    %365 = vmatprep.subr.mxu0 %v304
    %366 = vmatpush1.msra.mxu0 %v303
    %367 = vmatprep.subr.mxu0 %v302
    %368 = vmatpush1.msra.mxu0 %v301
    %369 = vmatprep.subr.mxu0 %v300
    %370 = vmatpush1.msra.mxu0 %v299
    %371 = vmatprep.subr.mxu0 %v298
    %372 = vmatpush1.msra.mxu0 %v297
    %373 = vmatprep.subr.mxu0 %v296
    %374 = vmatpush1.msra.mxu0 %v295
    %375 = vmatprep.subr.mxu0 %v294
    %376 = vmatpush1.msra.mxu0 %v293
    %377 = vmatprep.subr.mxu0 %v292
    %378 = vmatpush1.msra.mxu0 %v291
    %379 = vmatprep.subr.mxu0 %v290
    %380 = vmatpush1.msra.mxu0 %v289
    %381 = vmatprep.subr.mxu0 %v288
    %382 = vmatpush1.msra.mxu0 %v287
    %383 = vmatprep.subr.mxu0 %v350
    %384 = vmatpush2.msra.mxu0 %v349
    %385 = vmatprep.subr.mxu0 %v348
    %386 = vmatpush2.msra.mxu0 %v347
    %387 = vmatprep.subr.mxu0 %v346
    %388 = vmatpush2.msra.mxu0 %v345
    %389 = vmatprep.subr.mxu0 %v344
    %390 = vmatpush2.msra.mxu0 %v343
    %391 = vmatprep.subr.mxu0 %v342
    %392 = vmatpush2.msra.mxu0 %v341
    %393 = vmatprep.subr.mxu0 %v340
    %394 = vmatpush2.msra.mxu0 %v339
    %395 = vmatprep.subr.mxu0 %v338
    %396 = vmatpush2.msra.mxu0 %v337
    %397 = vmatprep.subr.mxu0 %v336
    %398 = vmatpush2.msra.mxu0 %v335
    %399 = vmatprep.subr.mxu0 %v334
    %400 = vmatpush2.msra.mxu0 %v333
    %401 = vmatprep.subr.mxu0 %v332
    %402 = vmatpush2.msra.mxu0 %v331
    %403 = vmatprep.subr.mxu0 %v330
    %404 = vmatpush2.msra.mxu0 %v329
    %405 = vmatprep.subr.mxu0 %v328
    %406 = vmatpush2.msra.mxu0 %v327
    %407 = vmatprep.subr.mxu0 %v326
    %408 = vmatpush2.msra.mxu0 %v325
    %409 = vmatprep.subr.mxu0 %v324
    %410 = vmatpush2.msra.mxu0 %v323
    %411 = vmatprep.subr.mxu0 %v322
    %412 = vmatpush2.msra.mxu0 %v321
    %413 = vmatprep.subr.mxu0 %v320
    %414 = vmatpush2.msra.mxu0 %v319
    %415 = vmatprep.mubr.f32.mxu0 %v286
    %416 = vmatmul.mubr.f32.gmra.mxu0 %v285
    %v417 = vpop.f32.mrf.mxu0
    %v418 = vadd.f32 0.0, %v417
    %v419 = vpop.f32.mrf.mxu0
    %v420 = vadd.f32 0.0, %v419
    %421 = vdwg.mxu0
    %v422 = vsub.f32 %v128, %v418
    %s423 = scalar_lea.vmem %s3, 256
    %v424 = vld [vmem:[%s423] sm:$0xff]
    %v425 = vld [vmem:[%s423 + $0x8] sm:$0xff]
    %v426 = vld [vmem:[%s423 + $0x10] sm:$0xff]
    %v427 = vld [vmem:[%s423 + $0x18] sm:$0xff]
    %v428 = vld [vmem:[%s423 + $0x20] sm:$0xff]
    %v429 = vld [vmem:[%s423 + $0x28] sm:$0xff]
    %v430 = vld [vmem:[%s423 + $0x30] sm:$0xff]
    %v431 = vld [vmem:[%s423 + $0x38] sm:$0xff]
    %v432 = vld [vmem:[%s423 + $0x40] sm:$0xff]
    %v433 = vld [vmem:[%s423 + $0x48] sm:$0xff]
    %v434 = vld [vmem:[%s423 + $0x50] sm:$0xff]
    %v435 = vld [vmem:[%s423 + $0x58] sm:$0xff]
    %v436 = vld [vmem:[%s423 + $0x60] sm:$0xff]
    %v437 = vld [vmem:[%s423 + $0x68] sm:$0xff]
    %v438 = vld [vmem:[%s423 + $0x70] sm:$0xff]
    %v439 = vld [vmem:[%s423 + $0x78] sm:$0xff]
    %v440 = vld [vmem:[%s423 + $0x80] sm:$0xff]
    %v441 = vld [vmem:[%s423 + $0x88] sm:$0xff]
    %v442 = vld [vmem:[%s423 + $0x90] sm:$0xff]
    %v443 = vld [vmem:[%s423 + $0x98] sm:$0xff]
    %v444 = vld [vmem:[%s423 + $0xa0] sm:$0xff]
    %v445 = vld [vmem:[%s423 + $0xa8] sm:$0xff]
    %v446 = vld [vmem:[%s423 + $0xb0] sm:$0xff]
    %v447 = vld [vmem:[%s423 + $0xb8] sm:$0xff]
    %v448 = vld [vmem:[%s423 + $0xc0] sm:$0xff]
    %v449 = vld [vmem:[%s423 + $0xc8] sm:$0xff]
    %v450 = vld [vmem:[%s423 + $0xd0] sm:$0xff]
    %v451 = vld [vmem:[%s423 + $0xd8] sm:$0xff]
    %v452 = vld [vmem:[%s423 + $0xe0] sm:$0xff]
    %v453 = vld [vmem:[%s423 + $0xe8] sm:$0xff]
    %v454 = vld [vmem:[%s423 + $0xf0] sm:$0xff]
    %v455 = vld [vmem:[%s423 + $0xf8] sm:$0xff]
    %456 = vmatprep.subr.mxu0 %v455
    %457 = vmatpush1.msra.mxu0 %v454
    %458 = vmatprep.subr.mxu0 %v453
    %459 = vmatpush1.msra.mxu0 %v452
    %460 = vmatprep.subr.mxu0 %v451
    %461 = vmatpush1.msra.mxu0 %v450
    %462 = vmatprep.subr.mxu0 %v449
    %463 = vmatpush1.msra.mxu0 %v448
    %464 = vmatprep.subr.mxu0 %v447
    %465 = vmatpush1.msra.mxu0 %v446
    %466 = vmatprep.subr.mxu0 %v445
    %467 = vmatpush1.msra.mxu0 %v444
    %468 = vmatprep.subr.mxu0 %v443
    %469 = vmatpush1.msra.mxu0 %v442
    %470 = vmatprep.subr.mxu0 %v441
    %471 = vmatpush1.msra.mxu0 %v440
    %472 = vmatprep.subr.mxu0 %v439
    %473 = vmatpush1.msra.mxu0 %v438
    %474 = vmatprep.subr.mxu0 %v437
    %475 = vmatpush1.msra.mxu0 %v436
    %476 = vmatprep.subr.mxu0 %v435
    %477 = vmatpush1.msra.mxu0 %v434
    %478 = vmatprep.subr.mxu0 %v433
    %479 = vmatpush1.msra.mxu0 %v432
    %480 = vmatprep.subr.mxu0 %v431
    %481 = vmatpush1.msra.mxu0 %v430
    %482 = vmatprep.subr.mxu0 %v429
    %483 = vmatpush1.msra.mxu0 %v428
    %484 = vmatprep.subr.mxu0 %v427
    %485 = vmatpush1.msra.mxu0 %v426
    %486 = vmatprep.subr.mxu0 %v425
    %487 = vmatpush1.msra.mxu0 %v424
    %488 = vmatprep.subr.mxu0 0.0
    %489 = vmatpush2.msra.mxu0 0.0
    %490 = vmatprep.subr.mxu0 0.0
    %491 = vmatpush2.msra.mxu0 0.0
    %492 = vmatprep.subr.mxu0 0.0
    %493 = vmatpush2.msra.mxu0 0.0
    %494 = vmatprep.subr.mxu0 0.0
    %495 = vmatpush2.msra.mxu0 0.0
    %496 = vmatprep.subr.mxu0 0.0
    %497 = vmatpush2.msra.mxu0 0.0
    %498 = vmatprep.subr.mxu0 0.0
    %499 = vmatpush2.msra.mxu0 0.0
    %500 = vmatprep.subr.mxu0 0.0
    %501 = vmatpush2.msra.mxu0 0.0
    %502 = vmatprep.subr.mxu0 0.0
    %503 = vmatpush2.msra.mxu0 0.0
    %504 = vmatprep.subr.mxu0 0.0
    %505 = vmatpush2.msra.mxu0 0.0
    %506 = vmatprep.subr.mxu0 0.0
    %507 = vmatpush2.msra.mxu0 0.0
    %508 = vmatprep.subr.mxu0 0.0
    %509 = vmatpush2.msra.mxu0 0.0
    %510 = vmatprep.subr.mxu0 0.0
    %511 = vmatpush2.msra.mxu0 0.0
    %512 = vmatprep.subr.mxu0 0.0
    %513 = vmatpush2.msra.mxu0 0.0
    %514 = vmatprep.subr.mxu0 0.0
    %515 = vmatpush2.msra.mxu0 0.0
    %516 = vmatprep.subr.mxu0 0.0
    %517 = vmatpush2.msra.mxu0 0.0
    %518 = vmatprep.subr.mxu0 0.0
    %519 = vmatpush2.msra.mxu0 0.0
    %520 = vmatprep.mubr.f32.mxu0 0.0
    %521 = vmatmul.mubr.f32.gmra.mxu0 %v422
    %v522 = vpop.f32.mrf.mxu0
    %v523 = vadd.f32 0.0, %v522
    %v524 = vpop.f32.mrf.mxu0
    %v525 = vadd.f32 0.0, %v524
    %526 = vdwg.mxu0
    %s527 = scalar_lea.vmem %s4, 2
    %v528 = vld [vmem:[%s527] sm:$0x3]
    %v529 = vmul.f32 %v523, 2.0
    %v530 = vmul.f32 %v525, 2.0
    %v532 = vlaneseq
    %v533 = vshrl.u32 %v532, 7
    %v534 = vsub.s32 0, %v533
    %v535 = vrot.slane %v528, %v534
    %v536 = vlaneseq
    %v537 = vshrl.u32 %v536, 7
    %v538 = vsub.s32 1, %v537
    %v539 = vrot.slane %v528, %v538
    %v542 = vsub.f32 %v535, %v529
    %v543 = vsub.f32 %v539, %v530
    %v544 = vsel %vm115, %v542, inf
    %v545 = vsel %vm115, %v543, inf
    %v546 = vmin.f32 %v544, %v545
    %547 = vmin.xlane.f32.xlu0 %v546
    %v548 = vpop.xlane.xlu0 %547
    %vm549 = vcmp.eq.f32.partialorder %v542, %v548
    %vm550 = vcmp.eq.f32.partialorder %v543, %v548
    %v551 = vsel %vm549, %v131, 256
    %v552 = vsel %vm550, %v132, 256
    %v553 = vsel %vm115, %v551, 2147483647
    %v554 = vsel %vm115, %v552, 2147483647
    %vm555 = vcmp.lt.s32.totalorder %v553, %v554
    %v556 = vsel %vm555, %v553, %v554
    %v557 = vand.u32 %v556, 65535
    %v558 = vshra.s32 %v556, 16
    %v559 = vcvt.s32.f32 %v557
    %v560 = vcvt.s32.f32 %v558
    %561 = vmin.xlane.f32.xlu0 %v560
    %v562 = vpop.xlane.xlu0 %561
    %vm563 = vcmp.eq.f32.partialorder %v560, %v562
    %v564 = vsel %vm563, %v559, inf
    %565 = vmin.xlane.f32.xlu0 %v564
    %v566 = vpop.xlane.xlu0 %565
    %v567 = vcvt.f32.s32 %v566
    %v568 = vcvt.f32.s32 %v562
    %v569 = vshll.u32 %v568, 16
    %v570 = vadd.s32 %v569, %v567
    %vm571 = vcmp.lt.s32.totalorder %v570, 255
    %v572 = vsel %vm571, %v570, 255
    %vm573 = vcmp.eq.s32.totalorder %v131, %v572
    %vm574 = vcmp.eq.s32.totalorder %v132, %v572
    %v575 = vsel %vm573, 1, 0
    %v576 = vsel %vm574, 1, 0
    %v577 = vcvt.s32.f32 %v575
    %v578 = vcvt.s32.f32 %v576
    %s579 = scalar_lea.vmem %s5, 512
    %v580 = vld [vmem:[%s579] sm:$0xff]
    %v581 = vld [vmem:[%s579 + $0x8] sm:$0xff]
    %v582 = vld [vmem:[%s579 + $0x10] sm:$0xff]
    %v583 = vld [vmem:[%s579 + $0x18] sm:$0xff]
    %v584 = vld [vmem:[%s579 + $0x20] sm:$0xff]
    %v585 = vld [vmem:[%s579 + $0x28] sm:$0xff]
    %v586 = vld [vmem:[%s579 + $0x30] sm:$0xff]
    %v587 = vld [vmem:[%s579 + $0x38] sm:$0xff]
    %v588 = vld [vmem:[%s579 + $0x40] sm:$0xff]
    %v589 = vld [vmem:[%s579 + $0x48] sm:$0xff]
    %v590 = vld [vmem:[%s579 + $0x50] sm:$0xff]
    %v591 = vld [vmem:[%s579 + $0x58] sm:$0xff]
    %v592 = vld [vmem:[%s579 + $0x60] sm:$0xff]
    %v593 = vld [vmem:[%s579 + $0x68] sm:$0xff]
    %v594 = vld [vmem:[%s579 + $0x70] sm:$0xff]
    %v595 = vld [vmem:[%s579 + $0x78] sm:$0xff]
    %v596 = vld [vmem:[%s579 + $0x80] sm:$0xff]
    %v597 = vld [vmem:[%s579 + $0x88] sm:$0xff]
    %v598 = vld [vmem:[%s579 + $0x90] sm:$0xff]
    %v599 = vld [vmem:[%s579 + $0x98] sm:$0xff]
    %v600 = vld [vmem:[%s579 + $0xa0] sm:$0xff]
    %v601 = vld [vmem:[%s579 + $0xa8] sm:$0xff]
    %v602 = vld [vmem:[%s579 + $0xb0] sm:$0xff]
    %v603 = vld [vmem:[%s579 + $0xb8] sm:$0xff]
    %v604 = vld [vmem:[%s579 + $0xc0] sm:$0xff]
    %v605 = vld [vmem:[%s579 + $0xc8] sm:$0xff]
    %v606 = vld [vmem:[%s579 + $0xd0] sm:$0xff]
    %v607 = vld [vmem:[%s579 + $0xd8] sm:$0xff]
    %v608 = vld [vmem:[%s579 + $0xe0] sm:$0xff]
    %v609 = vld [vmem:[%s579 + $0xe8] sm:$0xff]
    %v610 = vld [vmem:[%s579 + $0xf0] sm:$0xff]
    %v611 = vld [vmem:[%s579 + $0xf8] sm:$0xff]
    %v612 = vld [vmem:[%s579 + $0x100] sm:$0xff]
    %v613 = vld [vmem:[%s579 + $0x108] sm:$0xff]
    %v614 = vld [vmem:[%s579 + $0x110] sm:$0xff]
    %v615 = vld [vmem:[%s579 + $0x118] sm:$0xff]
    %v616 = vld [vmem:[%s579 + $0x120] sm:$0xff]
    %v617 = vld [vmem:[%s579 + $0x128] sm:$0xff]
    %v618 = vld [vmem:[%s579 + $0x130] sm:$0xff]
    %v619 = vld [vmem:[%s579 + $0x138] sm:$0xff]
    %v620 = vld [vmem:[%s579 + $0x140] sm:$0xff]
    %v621 = vld [vmem:[%s579 + $0x148] sm:$0xff]
    %v622 = vld [vmem:[%s579 + $0x150] sm:$0xff]
    %v623 = vld [vmem:[%s579 + $0x158] sm:$0xff]
    %v624 = vld [vmem:[%s579 + $0x160] sm:$0xff]
    %v625 = vld [vmem:[%s579 + $0x168] sm:$0xff]
    %v626 = vld [vmem:[%s579 + $0x170] sm:$0xff]
    %v627 = vld [vmem:[%s579 + $0x178] sm:$0xff]
    %v628 = vld [vmem:[%s579 + $0x180] sm:$0xff]
    %v629 = vld [vmem:[%s579 + $0x188] sm:$0xff]
    %v630 = vld [vmem:[%s579 + $0x190] sm:$0xff]
    %v631 = vld [vmem:[%s579 + $0x198] sm:$0xff]
    %v632 = vld [vmem:[%s579 + $0x1a0] sm:$0xff]
    %v633 = vld [vmem:[%s579 + $0x1a8] sm:$0xff]
    %v634 = vld [vmem:[%s579 + $0x1b0] sm:$0xff]
    %v635 = vld [vmem:[%s579 + $0x1b8] sm:$0xff]
    %v636 = vld [vmem:[%s579 + $0x1c0] sm:$0xff]
    %v637 = vld [vmem:[%s579 + $0x1c8] sm:$0xff]
    %v638 = vld [vmem:[%s579 + $0x1d0] sm:$0xff]
    %v639 = vld [vmem:[%s579 + $0x1d8] sm:$0xff]
    %v640 = vld [vmem:[%s579 + $0x1e0] sm:$0xff]
    %v641 = vld [vmem:[%s579 + $0x1e8] sm:$0xff]
    %v642 = vld [vmem:[%s579 + $0x1f0] sm:$0xff]
    %v643 = vld [vmem:[%s579 + $0x1f8] sm:$0xff]
    %644 = vmatprep.subr.mxu0 %v611
    %645 = vmatpush1.msra.mxu0 %v610
    %646 = vmatprep.subr.mxu0 %v609
    %647 = vmatpush1.msra.mxu0 %v608
    %648 = vmatprep.subr.mxu0 %v607
    %649 = vmatpush1.msra.mxu0 %v606
    %650 = vmatprep.subr.mxu0 %v605
    %651 = vmatpush1.msra.mxu0 %v604
    %652 = vmatprep.subr.mxu0 %v603
    %653 = vmatpush1.msra.mxu0 %v602
    %654 = vmatprep.subr.mxu0 %v601
    %655 = vmatpush1.msra.mxu0 %v600
    %656 = vmatprep.subr.mxu0 %v599
    %657 = vmatpush1.msra.mxu0 %v598
    %658 = vmatprep.subr.mxu0 %v597
    %659 = vmatpush1.msra.mxu0 %v596
    %660 = vmatprep.subr.mxu0 %v595
    %661 = vmatpush1.msra.mxu0 %v594
    %662 = vmatprep.subr.mxu0 %v593
    %663 = vmatpush1.msra.mxu0 %v592
    %664 = vmatprep.subr.mxu0 %v591
    %665 = vmatpush1.msra.mxu0 %v590
    %666 = vmatprep.subr.mxu0 %v589
    %667 = vmatpush1.msra.mxu0 %v588
    %668 = vmatprep.subr.mxu0 %v587
    %669 = vmatpush1.msra.mxu0 %v586
    %670 = vmatprep.subr.mxu0 %v585
    %671 = vmatpush1.msra.mxu0 %v584
    %672 = vmatprep.subr.mxu0 %v583
    %673 = vmatpush1.msra.mxu0 %v582
    %674 = vmatprep.subr.mxu0 %v581
    %675 = vmatpush1.msra.mxu0 %v580
    %676 = vmatprep.subr.mxu0 %v643
    %677 = vmatpush2.msra.mxu0 %v642
    %678 = vmatprep.subr.mxu0 %v641
    %679 = vmatpush2.msra.mxu0 %v640
    %680 = vmatprep.subr.mxu0 %v639
    %681 = vmatpush2.msra.mxu0 %v638
    %682 = vmatprep.subr.mxu0 %v637
    %683 = vmatpush2.msra.mxu0 %v636
    %684 = vmatprep.subr.mxu0 %v635
    %685 = vmatpush2.msra.mxu0 %v634
    %686 = vmatprep.subr.mxu0 %v633
    %687 = vmatpush2.msra.mxu0 %v632
    %688 = vmatprep.subr.mxu0 %v631
    %689 = vmatpush2.msra.mxu0 %v630
    %690 = vmatprep.subr.mxu0 %v629
    %691 = vmatpush2.msra.mxu0 %v628
    %692 = vmatprep.subr.mxu0 %v627
    %693 = vmatpush2.msra.mxu0 %v626
    %694 = vmatprep.subr.mxu0 %v625
    %695 = vmatpush2.msra.mxu0 %v624
    %696 = vmatprep.subr.mxu0 %v623
    %697 = vmatpush2.msra.mxu0 %v622
    %698 = vmatprep.subr.mxu0 %v621
    %699 = vmatpush2.msra.mxu0 %v620
    %700 = vmatprep.subr.mxu0 %v619
    %701 = vmatpush2.msra.mxu0 %v618
    %702 = vmatprep.subr.mxu0 %v617
    %703 = vmatpush2.msra.mxu0 %v616
    %704 = vmatprep.subr.mxu0 %v615
    %705 = vmatpush2.msra.mxu0 %v614
    %706 = vmatprep.subr.mxu0 %v613
    %707 = vmatpush2.msra.mxu0 %v612
    %708 = vmatprep.mubr.f32.mxu0 %v578
    %709 = vmatmul.mubr.f32.gmra.mxu0 %v577
    %v710 = vpop.f32.mrf.mxu0
    %v711 = vadd.f32 0.0, %v710
    %v712 = vpop.f32.mrf.mxu0
    %v713 = vadd.f32 0.0, %v712
    %714 = vdwg.mxu0
    %v715 = vsub.f32 %v422, %v711
    %s716 = scalar_lea.vmem %s3, 512
    %v717 = vld [vmem:[%s716] sm:$0xff]
    %v718 = vld [vmem:[%s716 + $0x8] sm:$0xff]
    %v719 = vld [vmem:[%s716 + $0x10] sm:$0xff]
    %v720 = vld [vmem:[%s716 + $0x18] sm:$0xff]
    %v721 = vld [vmem:[%s716 + $0x20] sm:$0xff]
    %v722 = vld [vmem:[%s716 + $0x28] sm:$0xff]
    %v723 = vld [vmem:[%s716 + $0x30] sm:$0xff]
    %v724 = vld [vmem:[%s716 + $0x38] sm:$0xff]
    %v725 = vld [vmem:[%s716 + $0x40] sm:$0xff]
    %v726 = vld [vmem:[%s716 + $0x48] sm:$0xff]
    %v727 = vld [vmem:[%s716 + $0x50] sm:$0xff]
    %v728 = vld [vmem:[%s716 + $0x58] sm:$0xff]
    %v729 = vld [vmem:[%s716 + $0x60] sm:$0xff]
    %v730 = vld [vmem:[%s716 + $0x68] sm:$0xff]
    %v731 = vld [vmem:[%s716 + $0x70] sm:$0xff]
    %v732 = vld [vmem:[%s716 + $0x78] sm:$0xff]
    %v733 = vld [vmem:[%s716 + $0x80] sm:$0xff]
    %v734 = vld [vmem:[%s716 + $0x88] sm:$0xff]
    %v735 = vld [vmem:[%s716 + $0x90] sm:$0xff]
    %v736 = vld [vmem:[%s716 + $0x98] sm:$0xff]
    %v737 = vld [vmem:[%s716 + $0xa0] sm:$0xff]
    %v738 = vld [vmem:[%s716 + $0xa8] sm:$0xff]
    %v739 = vld [vmem:[%s716 + $0xb0] sm:$0xff]
    %v740 = vld [vmem:[%s716 + $0xb8] sm:$0xff]
    %v741 = vld [vmem:[%s716 + $0xc0] sm:$0xff]
    %v742 = vld [vmem:[%s716 + $0xc8] sm:$0xff]
    %v743 = vld [vmem:[%s716 + $0xd0] sm:$0xff]
    %v744 = vld [vmem:[%s716 + $0xd8] sm:$0xff]
    %v745 = vld [vmem:[%s716 + $0xe0] sm:$0xff]
    %v746 = vld [vmem:[%s716 + $0xe8] sm:$0xff]
    %v747 = vld [vmem:[%s716 + $0xf0] sm:$0xff]
    %v748 = vld [vmem:[%s716 + $0xf8] sm:$0xff]
    %749 = vmatprep.subr.mxu0 %v748
    %750 = vmatpush1.msra.mxu0 %v747
    %751 = vmatprep.subr.mxu0 %v746
    %752 = vmatpush1.msra.mxu0 %v745
    %753 = vmatprep.subr.mxu0 %v744
    %754 = vmatpush1.msra.mxu0 %v743
    %755 = vmatprep.subr.mxu0 %v742
    %756 = vmatpush1.msra.mxu0 %v741
    %757 = vmatprep.subr.mxu0 %v740
    %758 = vmatpush1.msra.mxu0 %v739
    %759 = vmatprep.subr.mxu0 %v738
    %760 = vmatpush1.msra.mxu0 %v737
    %761 = vmatprep.subr.mxu0 %v736
    %762 = vmatpush1.msra.mxu0 %v735
    %763 = vmatprep.subr.mxu0 %v734
    %764 = vmatpush1.msra.mxu0 %v733
    %765 = vmatprep.subr.mxu0 %v732
    %766 = vmatpush1.msra.mxu0 %v731
    %767 = vmatprep.subr.mxu0 %v730
    %768 = vmatpush1.msra.mxu0 %v729
    %769 = vmatprep.subr.mxu0 %v728
    %770 = vmatpush1.msra.mxu0 %v727
    %771 = vmatprep.subr.mxu0 %v726
    %772 = vmatpush1.msra.mxu0 %v725
    %773 = vmatprep.subr.mxu0 %v724
    %774 = vmatpush1.msra.mxu0 %v723
    %775 = vmatprep.subr.mxu0 %v722
    %776 = vmatpush1.msra.mxu0 %v721
    %777 = vmatprep.subr.mxu0 %v720
    %778 = vmatpush1.msra.mxu0 %v719
    %779 = vmatprep.subr.mxu0 %v718
    %780 = vmatpush1.msra.mxu0 %v717
    %781 = vmatprep.subr.mxu0 0.0
    %782 = vmatpush2.msra.mxu0 0.0
    %783 = vmatprep.subr.mxu0 0.0
    %784 = vmatpush2.msra.mxu0 0.0
    %785 = vmatprep.subr.mxu0 0.0
    %786 = vmatpush2.msra.mxu0 0.0
    %787 = vmatprep.subr.mxu0 0.0
    %788 = vmatpush2.msra.mxu0 0.0
    %789 = vmatprep.subr.mxu0 0.0
    %790 = vmatpush2.msra.mxu0 0.0
    %791 = vmatprep.subr.mxu0 0.0
    %792 = vmatpush2.msra.mxu0 0.0
    %793 = vmatprep.subr.mxu0 0.0
    %794 = vmatpush2.msra.mxu0 0.0
    %795 = vmatprep.subr.mxu0 0.0
    %796 = vmatpush2.msra.mxu0 0.0
    %797 = vmatprep.subr.mxu0 0.0
    %798 = vmatpush2.msra.mxu0 0.0
    %799 = vmatprep.subr.mxu0 0.0
    %800 = vmatpush2.msra.mxu0 0.0
    %801 = vmatprep.subr.mxu0 0.0
    %802 = vmatpush2.msra.mxu0 0.0
    %803 = vmatprep.subr.mxu0 0.0
    %804 = vmatpush2.msra.mxu0 0.0
    %805 = vmatprep.subr.mxu0 0.0
    %806 = vmatpush2.msra.mxu0 0.0
    %807 = vmatprep.subr.mxu0 0.0
    %808 = vmatpush2.msra.mxu0 0.0
    %809 = vmatprep.subr.mxu0 0.0
    %810 = vmatpush2.msra.mxu0 0.0
    %811 = vmatprep.subr.mxu0 0.0
    %812 = vmatpush2.msra.mxu0 0.0
    %813 = vmatprep.mubr.f32.mxu0 0.0
    %814 = vmatmul.mubr.f32.gmra.mxu0 %v715
    %v815 = vpop.f32.mrf.mxu0
    %v816 = vadd.f32 0.0, %v815
    %v817 = vpop.f32.mrf.mxu0
    %v818 = vadd.f32 0.0, %v817
    %819 = vdwg.mxu0
    %s820 = scalar_lea.vmem %s4, 4
    %v821 = vld [vmem:[%s820] sm:$0x3]
    %v822 = vmul.f32 %v816, 2.0
    %v823 = vmul.f32 %v818, 2.0
    %v825 = vlaneseq
    %v826 = vshrl.u32 %v825, 7
    %v827 = vsub.s32 0, %v826
    %v828 = vrot.slane %v821, %v827
    %v829 = vlaneseq
    %v830 = vshrl.u32 %v829, 7
    %v831 = vsub.s32 1, %v830
    %v832 = vrot.slane %v821, %v831
    %v835 = vsub.f32 %v828, %v822
    %v836 = vsub.f32 %v832, %v823
    %v837 = vsel %vm115, %v835, inf
    %v838 = vsel %vm115, %v836, inf
    %v839 = vmin.f32 %v837, %v838
    %840 = vmin.xlane.f32.xlu0 %v839
    %v841 = vpop.xlane.xlu0 %840
    %vm842 = vcmp.eq.f32.partialorder %v835, %v841
    %vm843 = vcmp.eq.f32.partialorder %v836, %v841
    %v844 = vsel %vm842, %v131, 256
    %v845 = vsel %vm843, %v132, 256
    %v846 = vsel %vm115, %v844, 2147483647
    %v847 = vsel %vm115, %v845, 2147483647
    %vm848 = vcmp.lt.s32.totalorder %v846, %v847
    %v849 = vsel %vm848, %v846, %v847
    %v850 = vand.u32 %v849, 65535
    %v851 = vshra.s32 %v849, 16
    %v852 = vcvt.s32.f32 %v850
    %v853 = vcvt.s32.f32 %v851
    %854 = vmin.xlane.f32.xlu0 %v853
    %v855 = vpop.xlane.xlu0 %854
    %vm856 = vcmp.eq.f32.partialorder %v853, %v855
    %v857 = vsel %vm856, %v852, inf
    %858 = vmin.xlane.f32.xlu0 %v857
    %v859 = vpop.xlane.xlu0 %858
    %v860 = vcvt.f32.s32 %v859
    %v861 = vcvt.f32.s32 %v855
    %v862 = vshll.u32 %v861, 16
    %v863 = vadd.s32 %v862, %v860
    %vm864 = vcmp.lt.s32.totalorder %v863, 255
    %v865 = vsel %vm864, %v863, 255
    %vm866 = vcmp.eq.s32.totalorder %v131, %v865
    %vm867 = vcmp.eq.s32.totalorder %v132, %v865
    %v868 = vsel %vm866, 1, 0
    %v869 = vsel %vm867, 1, 0
    %v870 = vcvt.s32.f32 %v868
    %v871 = vcvt.s32.f32 %v869
    %s872 = scalar_lea.vmem %s5, 1024
    %v873 = vld [vmem:[%s872] sm:$0xff]
    %v874 = vld [vmem:[%s872 + $0x8] sm:$0xff]
    %v875 = vld [vmem:[%s872 + $0x10] sm:$0xff]
    %v876 = vld [vmem:[%s872 + $0x18] sm:$0xff]
    %v877 = vld [vmem:[%s872 + $0x20] sm:$0xff]
    %v878 = vld [vmem:[%s872 + $0x28] sm:$0xff]
    %v879 = vld [vmem:[%s872 + $0x30] sm:$0xff]
    %v880 = vld [vmem:[%s872 + $0x38] sm:$0xff]
    %v881 = vld [vmem:[%s872 + $0x40] sm:$0xff]
    %v882 = vld [vmem:[%s872 + $0x48] sm:$0xff]
    %v883 = vld [vmem:[%s872 + $0x50] sm:$0xff]
    %v884 = vld [vmem:[%s872 + $0x58] sm:$0xff]
    %v885 = vld [vmem:[%s872 + $0x60] sm:$0xff]
    %v886 = vld [vmem:[%s872 + $0x68] sm:$0xff]
    %v887 = vld [vmem:[%s872 + $0x70] sm:$0xff]
    %v888 = vld [vmem:[%s872 + $0x78] sm:$0xff]
    %v889 = vld [vmem:[%s872 + $0x80] sm:$0xff]
    %v890 = vld [vmem:[%s872 + $0x88] sm:$0xff]
    %v891 = vld [vmem:[%s872 + $0x90] sm:$0xff]
    %v892 = vld [vmem:[%s872 + $0x98] sm:$0xff]
    %v893 = vld [vmem:[%s872 + $0xa0] sm:$0xff]
    %v894 = vld [vmem:[%s872 + $0xa8] sm:$0xff]
    %v895 = vld [vmem:[%s872 + $0xb0] sm:$0xff]
    %v896 = vld [vmem:[%s872 + $0xb8] sm:$0xff]
    %v897 = vld [vmem:[%s872 + $0xc0] sm:$0xff]
    %v898 = vld [vmem:[%s872 + $0xc8] sm:$0xff]
    %v899 = vld [vmem:[%s872 + $0xd0] sm:$0xff]
    %v900 = vld [vmem:[%s872 + $0xd8] sm:$0xff]
    %v901 = vld [vmem:[%s872 + $0xe0] sm:$0xff]
    %v902 = vld [vmem:[%s872 + $0xe8] sm:$0xff]
    %v903 = vld [vmem:[%s872 + $0xf0] sm:$0xff]
    %v904 = vld [vmem:[%s872 + $0xf8] sm:$0xff]
    %v905 = vld [vmem:[%s872 + $0x100] sm:$0xff]
    %v906 = vld [vmem:[%s872 + $0x108] sm:$0xff]
    %v907 = vld [vmem:[%s872 + $0x110] sm:$0xff]
    %v908 = vld [vmem:[%s872 + $0x118] sm:$0xff]
    %v909 = vld [vmem:[%s872 + $0x120] sm:$0xff]
    %v910 = vld [vmem:[%s872 + $0x128] sm:$0xff]
    %v911 = vld [vmem:[%s872 + $0x130] sm:$0xff]
    %v912 = vld [vmem:[%s872 + $0x138] sm:$0xff]
    %v913 = vld [vmem:[%s872 + $0x140] sm:$0xff]
    %v914 = vld [vmem:[%s872 + $0x148] sm:$0xff]
    %v915 = vld [vmem:[%s872 + $0x150] sm:$0xff]
    %v916 = vld [vmem:[%s872 + $0x158] sm:$0xff]
    %v917 = vld [vmem:[%s872 + $0x160] sm:$0xff]
    %v918 = vld [vmem:[%s872 + $0x168] sm:$0xff]
    %v919 = vld [vmem:[%s872 + $0x170] sm:$0xff]
    %v920 = vld [vmem:[%s872 + $0x178] sm:$0xff]
    %v921 = vld [vmem:[%s872 + $0x180] sm:$0xff]
    %v922 = vld [vmem:[%s872 + $0x188] sm:$0xff]
    %v923 = vld [vmem:[%s872 + $0x190] sm:$0xff]
    %v924 = vld [vmem:[%s872 + $0x198] sm:$0xff]
    %v925 = vld [vmem:[%s872 + $0x1a0] sm:$0xff]
    %v926 = vld [vmem:[%s872 + $0x1a8] sm:$0xff]
    %v927 = vld [vmem:[%s872 + $0x1b0] sm:$0xff]
    %v928 = vld [vmem:[%s872 + $0x1b8] sm:$0xff]
    %v929 = vld [vmem:[%s872 + $0x1c0] sm:$0xff]
    %v930 = vld [vmem:[%s872 + $0x1c8] sm:$0xff]
    %v931 = vld [vmem:[%s872 + $0x1d0] sm:$0xff]
    %v932 = vld [vmem:[%s872 + $0x1d8] sm:$0xff]
    %v933 = vld [vmem:[%s872 + $0x1e0] sm:$0xff]
    %v934 = vld [vmem:[%s872 + $0x1e8] sm:$0xff]
    %v935 = vld [vmem:[%s872 + $0x1f0] sm:$0xff]
    %v936 = vld [vmem:[%s872 + $0x1f8] sm:$0xff]
    %937 = vmatprep.subr.mxu0 %v904
    %938 = vmatpush1.msra.mxu0 %v903
    %939 = vmatprep.subr.mxu0 %v902
    %940 = vmatpush1.msra.mxu0 %v901
    %941 = vmatprep.subr.mxu0 %v900
    %942 = vmatpush1.msra.mxu0 %v899
    %943 = vmatprep.subr.mxu0 %v898
    %944 = vmatpush1.msra.mxu0 %v897
    %945 = vmatprep.subr.mxu0 %v896
    %946 = vmatpush1.msra.mxu0 %v895
    %947 = vmatprep.subr.mxu0 %v894
    %948 = vmatpush1.msra.mxu0 %v893
    %949 = vmatprep.subr.mxu0 %v892
    %950 = vmatpush1.msra.mxu0 %v891
    %951 = vmatprep.subr.mxu0 %v890
    %952 = vmatpush1.msra.mxu0 %v889
    %953 = vmatprep.subr.mxu0 %v888
    %954 = vmatpush1.msra.mxu0 %v887
    %955 = vmatprep.subr.mxu0 %v886
    %956 = vmatpush1.msra.mxu0 %v885
    %957 = vmatprep.subr.mxu0 %v884
    %958 = vmatpush1.msra.mxu0 %v883
    %959 = vmatprep.subr.mxu0 %v882
    %960 = vmatpush1.msra.mxu0 %v881
    %961 = vmatprep.subr.mxu0 %v880
    %962 = vmatpush1.msra.mxu0 %v879
    %963 = vmatprep.subr.mxu0 %v878
    %964 = vmatpush1.msra.mxu0 %v877
    %965 = vmatprep.subr.mxu0 %v876
    %966 = vmatpush1.msra.mxu0 %v875
    %967 = vmatprep.subr.mxu0 %v874
    %968 = vmatpush1.msra.mxu0 %v873
    %969 = vmatprep.subr.mxu0 %v936
    %970 = vmatpush2.msra.mxu0 %v935
    %971 = vmatprep.subr.mxu0 %v934
    %972 = vmatpush2.msra.mxu0 %v933
    %973 = vmatprep.subr.mxu0 %v932
    %974 = vmatpush2.msra.mxu0 %v931
    %975 = vmatprep.subr.mxu0 %v930
    %976 = vmatpush2.msra.mxu0 %v929
    %977 = vmatprep.subr.mxu0 %v928
    %978 = vmatpush2.msra.mxu0 %v927
    %979 = vmatprep.subr.mxu0 %v926
    %980 = vmatpush2.msra.mxu0 %v925
    %981 = vmatprep.subr.mxu0 %v924
    %982 = vmatpush2.msra.mxu0 %v923
    %983 = vmatprep.subr.mxu0 %v922
    %984 = vmatpush2.msra.mxu0 %v921
    %985 = vmatprep.subr.mxu0 %v920
    %986 = vmatpush2.msra.mxu0 %v919
    %987 = vmatprep.subr.mxu0 %v918
    %988 = vmatpush2.msra.mxu0 %v917
    %989 = vmatprep.subr.mxu0 %v916
    %990 = vmatpush2.msra.mxu0 %v915
    %991 = vmatprep.subr.mxu0 %v914
    %992 = vmatpush2.msra.mxu0 %v913
    %993 = vmatprep.subr.mxu0 %v912
    %994 = vmatpush2.msra.mxu0 %v911
    %995 = vmatprep.subr.mxu0 %v910
    %996 = vmatpush2.msra.mxu0 %v909
    %997 = vmatprep.subr.mxu0 %v908
    %998 = vmatpush2.msra.mxu0 %v907
    %999 = vmatprep.subr.mxu0 %v906
    %1000 = vmatpush2.msra.mxu0 %v905
    %1001 = vmatprep.mubr.f32.mxu0 %v871
    %1002 = vmatmul.mubr.f32.gmra.mxu0 %v870
    %v1003 = vpop.f32.mrf.mxu0
    %v1004 = vadd.f32 0.0, %v1003
    %v1005 = vpop.f32.mrf.mxu0
    %v1006 = vadd.f32 0.0, %v1005
    %1007 = vdwg.mxu0
    %v1008 = vsub.f32 %v715, %v1004
    %s1009 = scalar_lea.vmem %s3, 768
    %v1010 = vld [vmem:[%s1009] sm:$0xff]
    %v1011 = vld [vmem:[%s1009 + $0x8] sm:$0xff]
    %v1012 = vld [vmem:[%s1009 + $0x10] sm:$0xff]
    %v1013 = vld [vmem:[%s1009 + $0x18] sm:$0xff]
    %v1014 = vld [vmem:[%s1009 + $0x20] sm:$0xff]
    %v1015 = vld [vmem:[%s1009 + $0x28] sm:$0xff]
    %v1016 = vld [vmem:[%s1009 + $0x30] sm:$0xff]
    %v1017 = vld [vmem:[%s1009 + $0x38] sm:$0xff]
    %v1018 = vld [vmem:[%s1009 + $0x40] sm:$0xff]
    %v1019 = vld [vmem:[%s1009 + $0x48] sm:$0xff]
    %v1020 = vld [vmem:[%s1009 + $0x50] sm:$0xff]
    %v1021 = vld [vmem:[%s1009 + $0x58] sm:$0xff]
    %v1022 = vld [vmem:[%s1009 + $0x60] sm:$0xff]
    %v1023 = vld [vmem:[%s1009 + $0x68] sm:$0xff]
    %v1024 = vld [vmem:[%s1009 + $0x70] sm:$0xff]
    %v1025 = vld [vmem:[%s1009 + $0x78] sm:$0xff]
    %v1026 = vld [vmem:[%s1009 + $0x80] sm:$0xff]
    %v1027 = vld [vmem:[%s1009 + $0x88] sm:$0xff]
    %v1028 = vld [vmem:[%s1009 + $0x90] sm:$0xff]
    %v1029 = vld [vmem:[%s1009 + $0x98] sm:$0xff]
    %v1030 = vld [vmem:[%s1009 + $0xa0] sm:$0xff]
    %v1031 = vld [vmem:[%s1009 + $0xa8] sm:$0xff]
    %v1032 = vld [vmem:[%s1009 + $0xb0] sm:$0xff]
    %v1033 = vld [vmem:[%s1009 + $0xb8] sm:$0xff]
    %v1034 = vld [vmem:[%s1009 + $0xc0] sm:$0xff]
    %v1035 = vld [vmem:[%s1009 + $0xc8] sm:$0xff]
    %v1036 = vld [vmem:[%s1009 + $0xd0] sm:$0xff]
    %v1037 = vld [vmem:[%s1009 + $0xd8] sm:$0xff]
    %v1038 = vld [vmem:[%s1009 + $0xe0] sm:$0xff]
    %v1039 = vld [vmem:[%s1009 + $0xe8] sm:$0xff]
    %v1040 = vld [vmem:[%s1009 + $0xf0] sm:$0xff]
    %v1041 = vld [vmem:[%s1009 + $0xf8] sm:$0xff]
    %1042 = vmatprep.subr.mxu0 %v1041
    %1043 = vmatpush1.msra.mxu0 %v1040
    %1044 = vmatprep.subr.mxu0 %v1039
    %1045 = vmatpush1.msra.mxu0 %v1038
    %1046 = vmatprep.subr.mxu0 %v1037
    %1047 = vmatpush1.msra.mxu0 %v1036
    %1048 = vmatprep.subr.mxu0 %v1035
    %1049 = vmatpush1.msra.mxu0 %v1034
    %1050 = vmatprep.subr.mxu0 %v1033
    %1051 = vmatpush1.msra.mxu0 %v1032
    %1052 = vmatprep.subr.mxu0 %v1031
    %1053 = vmatpush1.msra.mxu0 %v1030
    %1054 = vmatprep.subr.mxu0 %v1029
    %1055 = vmatpush1.msra.mxu0 %v1028
    %1056 = vmatprep.subr.mxu0 %v1027
    %1057 = vmatpush1.msra.mxu0 %v1026
    %1058 = vmatprep.subr.mxu0 %v1025
    %1059 = vmatpush1.msra.mxu0 %v1024
    %1060 = vmatprep.subr.mxu0 %v1023
    %1061 = vmatpush1.msra.mxu0 %v1022
    %1062 = vmatprep.subr.mxu0 %v1021
    %1063 = vmatpush1.msra.mxu0 %v1020
    %1064 = vmatprep.subr.mxu0 %v1019
    %1065 = vmatpush1.msra.mxu0 %v1018
    %1066 = vmatprep.subr.mxu0 %v1017
    %1067 = vmatpush1.msra.mxu0 %v1016
    %1068 = vmatprep.subr.mxu0 %v1015
    %1069 = vmatpush1.msra.mxu0 %v1014
    %1070 = vmatprep.subr.mxu0 %v1013
    %1071 = vmatpush1.msra.mxu0 %v1012
    %1072 = vmatprep.subr.mxu0 %v1011
    %1073 = vmatpush1.msra.mxu0 %v1010
    %1074 = vmatprep.subr.mxu0 0.0
    %1075 = vmatpush2.msra.mxu0 0.0
    %1076 = vmatprep.subr.mxu0 0.0
    %1077 = vmatpush2.msra.mxu0 0.0
    %1078 = vmatprep.subr.mxu0 0.0
    %1079 = vmatpush2.msra.mxu0 0.0
    %1080 = vmatprep.subr.mxu0 0.0
    %1081 = vmatpush2.msra.mxu0 0.0
    %1082 = vmatprep.subr.mxu0 0.0
    %1083 = vmatpush2.msra.mxu0 0.0
    %1084 = vmatprep.subr.mxu0 0.0
    %1085 = vmatpush2.msra.mxu0 0.0
    %1086 = vmatprep.subr.mxu0 0.0
    %1087 = vmatpush2.msra.mxu0 0.0
    %1088 = vmatprep.subr.mxu0 0.0
    %1089 = vmatpush2.msra.mxu0 0.0
    %1090 = vmatprep.subr.mxu0 0.0
    %1091 = vmatpush2.msra.mxu0 0.0
    %1092 = vmatprep.subr.mxu0 0.0
    %1093 = vmatpush2.msra.mxu0 0.0
    %1094 = vmatprep.subr.mxu0 0.0
    %1095 = vmatpush2.msra.mxu0 0.0
    %1096 = vmatprep.subr.mxu0 0.0
    %1097 = vmatpush2.msra.mxu0 0.0
    %1098 = vmatprep.subr.mxu0 0.0
    %1099 = vmatpush2.msra.mxu0 0.0
    %1100 = vmatprep.subr.mxu0 0.0
    %1101 = vmatpush2.msra.mxu0 0.0
    %1102 = vmatprep.subr.mxu0 0.0
    %1103 = vmatpush2.msra.mxu0 0.0
    %1104 = vmatprep.subr.mxu0 0.0
    %1105 = vmatpush2.msra.mxu0 0.0
    %1106 = vmatprep.mubr.f32.mxu0 0.0
    %1107 = vmatmul.mubr.f32.gmra.mxu0 %v1008
    %v1108 = vpop.f32.mrf.mxu0
    %v1109 = vadd.f32 0.0, %v1108
    %v1110 = vpop.f32.mrf.mxu0
    %v1111 = vadd.f32 0.0, %v1110
    %1112 = vdwg.mxu0
    %s1113 = scalar_lea.vmem %s4, 6
    %v1114 = vld [vmem:[%s1113] sm:$0x3]
    %v1115 = vmul.f32 %v1109, 2.0
    %v1116 = vmul.f32 %v1111, 2.0
    %v1118 = vlaneseq
    %v1119 = vshrl.u32 %v1118, 7
    %v1120 = vsub.s32 0, %v1119
    %v1121 = vrot.slane %v1114, %v1120
    %v1122 = vlaneseq
    %v1123 = vshrl.u32 %v1122, 7
    %v1124 = vsub.s32 1, %v1123
    %v1125 = vrot.slane %v1114, %v1124
    %v1128 = vsub.f32 %v1121, %v1115
    %v1129 = vsub.f32 %v1125, %v1116
    %v1130 = vsel %vm115, %v1128, inf
    %v1131 = vsel %vm115, %v1129, inf
    %v1132 = vmin.f32 %v1130, %v1131
    %1133 = vmin.xlane.f32.xlu0 %v1132
    %v1134 = vpop.xlane.xlu0 %1133
    %vm1135 = vcmp.eq.f32.partialorder %v1128, %v1134
    %vm1136 = vcmp.eq.f32.partialorder %v1129, %v1134
    %v1137 = vsel %vm1135, %v131, 256
    %v1138 = vsel %vm1136, %v132, 256
    %v1139 = vsel %vm115, %v1137, 2147483647
    %v1140 = vsel %vm115, %v1138, 2147483647
    %vm1141 = vcmp.lt.s32.totalorder %v1139, %v1140
    %v1142 = vsel %vm1141, %v1139, %v1140
    %v1143 = vand.u32 %v1142, 65535
    %v1144 = vshra.s32 %v1142, 16
    %v1145 = vcvt.s32.f32 %v1143
    %v1146 = vcvt.s32.f32 %v1144
    %1147 = vmin.xlane.f32.xlu0 %v1146
    %v1148 = vpop.xlane.xlu0 %1147
    %vm1149 = vcmp.eq.f32.partialorder %v1146, %v1148
    %v1150 = vsel %vm1149, %v1145, inf
    %1151 = vmin.xlane.f32.xlu0 %v1150
    %v1152 = vpop.xlane.xlu0 %1151
    %v1153 = vcvt.f32.s32 %v1152
    %v1154 = vcvt.f32.s32 %v1148
    %v1155 = vshll.u32 %v1154, 16
    %v1156 = vadd.s32 %v1155, %v1153
    %vm1157 = vcmp.lt.s32.totalorder %v1156, 255
    %v1158 = vsel %vm1157, %v1156, 255
    %vm1159 = vcmp.eq.s32.totalorder %v131, %v1158
    %vm1160 = vcmp.eq.s32.totalorder %v132, %v1158
    %v1161 = vsel %vm1159, 1, 0
    %v1162 = vsel %vm1160, 1, 0
    %v1163 = vcvt.s32.f32 %v1161
    %v1164 = vcvt.s32.f32 %v1162
    %s1165 = scalar_lea.vmem %s5, 1536
    %v1166 = vld [vmem:[%s1165] sm:$0xff]
    %v1167 = vld [vmem:[%s1165 + $0x8] sm:$0xff]
    %v1168 = vld [vmem:[%s1165 + $0x10] sm:$0xff]
    %v1169 = vld [vmem:[%s1165 + $0x18] sm:$0xff]
    %v1170 = vld [vmem:[%s1165 + $0x20] sm:$0xff]
    %v1171 = vld [vmem:[%s1165 + $0x28] sm:$0xff]
    %v1172 = vld [vmem:[%s1165 + $0x30] sm:$0xff]
    %v1173 = vld [vmem:[%s1165 + $0x38] sm:$0xff]
    %v1174 = vld [vmem:[%s1165 + $0x40] sm:$0xff]
    %v1175 = vld [vmem:[%s1165 + $0x48] sm:$0xff]
    %v1176 = vld [vmem:[%s1165 + $0x50] sm:$0xff]
    %v1177 = vld [vmem:[%s1165 + $0x58] sm:$0xff]
    %v1178 = vld [vmem:[%s1165 + $0x60] sm:$0xff]
    %v1179 = vld [vmem:[%s1165 + $0x68] sm:$0xff]
    %v1180 = vld [vmem:[%s1165 + $0x70] sm:$0xff]
    %v1181 = vld [vmem:[%s1165 + $0x78] sm:$0xff]
    %v1182 = vld [vmem:[%s1165 + $0x80] sm:$0xff]
    %v1183 = vld [vmem:[%s1165 + $0x88] sm:$0xff]
    %v1184 = vld [vmem:[%s1165 + $0x90] sm:$0xff]
    %v1185 = vld [vmem:[%s1165 + $0x98] sm:$0xff]
    %v1186 = vld [vmem:[%s1165 + $0xa0] sm:$0xff]
    %v1187 = vld [vmem:[%s1165 + $0xa8] sm:$0xff]
    %v1188 = vld [vmem:[%s1165 + $0xb0] sm:$0xff]
    %v1189 = vld [vmem:[%s1165 + $0xb8] sm:$0xff]
    %v1190 = vld [vmem:[%s1165 + $0xc0] sm:$0xff]
    %v1191 = vld [vmem:[%s1165 + $0xc8] sm:$0xff]
    %v1192 = vld [vmem:[%s1165 + $0xd0] sm:$0xff]
    %v1193 = vld [vmem:[%s1165 + $0xd8] sm:$0xff]
    %v1194 = vld [vmem:[%s1165 + $0xe0] sm:$0xff]
    %v1195 = vld [vmem:[%s1165 + $0xe8] sm:$0xff]
    %v1196 = vld [vmem:[%s1165 + $0xf0] sm:$0xff]
    %v1197 = vld [vmem:[%s1165 + $0xf8] sm:$0xff]
    %v1198 = vld [vmem:[%s1165 + $0x100] sm:$0xff]
    %v1199 = vld [vmem:[%s1165 + $0x108] sm:$0xff]
    %v1200 = vld [vmem:[%s1165 + $0x110] sm:$0xff]
    %v1201 = vld [vmem:[%s1165 + $0x118] sm:$0xff]
    %v1202 = vld [vmem:[%s1165 + $0x120] sm:$0xff]
    %v1203 = vld [vmem:[%s1165 + $0x128] sm:$0xff]
    %v1204 = vld [vmem:[%s1165 + $0x130] sm:$0xff]
    %v1205 = vld [vmem:[%s1165 + $0x138] sm:$0xff]
    %v1206 = vld [vmem:[%s1165 + $0x140] sm:$0xff]
    %v1207 = vld [vmem:[%s1165 + $0x148] sm:$0xff]
    %v1208 = vld [vmem:[%s1165 + $0x150] sm:$0xff]
    %v1209 = vld [vmem:[%s1165 + $0x158] sm:$0xff]
    %v1210 = vld [vmem:[%s1165 + $0x160] sm:$0xff]
    %v1211 = vld [vmem:[%s1165 + $0x168] sm:$0xff]
    %v1212 = vld [vmem:[%s1165 + $0x170] sm:$0xff]
    %v1213 = vld [vmem:[%s1165 + $0x178] sm:$0xff]
    %v1214 = vld [vmem:[%s1165 + $0x180] sm:$0xff]
    %v1215 = vld [vmem:[%s1165 + $0x188] sm:$0xff]
    %v1216 = vld [vmem:[%s1165 + $0x190] sm:$0xff]
    %v1217 = vld [vmem:[%s1165 + $0x198] sm:$0xff]
    %v1218 = vld [vmem:[%s1165 + $0x1a0] sm:$0xff]
    %v1219 = vld [vmem:[%s1165 + $0x1a8] sm:$0xff]
    %v1220 = vld [vmem:[%s1165 + $0x1b0] sm:$0xff]
    %v1221 = vld [vmem:[%s1165 + $0x1b8] sm:$0xff]
    %v1222 = vld [vmem:[%s1165 + $0x1c0] sm:$0xff]
    %v1223 = vld [vmem:[%s1165 + $0x1c8] sm:$0xff]
    %v1224 = vld [vmem:[%s1165 + $0x1d0] sm:$0xff]
    %v1225 = vld [vmem:[%s1165 + $0x1d8] sm:$0xff]
    %v1226 = vld [vmem:[%s1165 + $0x1e0] sm:$0xff]
    %v1227 = vld [vmem:[%s1165 + $0x1e8] sm:$0xff]
    %v1228 = vld [vmem:[%s1165 + $0x1f0] sm:$0xff]
    %v1229 = vld [vmem:[%s1165 + $0x1f8] sm:$0xff]
    %1230 = vmatprep.subr.mxu0 %v1197
    %1231 = vmatpush1.msra.mxu0 %v1196
    %1232 = vmatprep.subr.mxu0 %v1195
    %1233 = vmatpush1.msra.mxu0 %v1194
    %1234 = vmatprep.subr.mxu0 %v1193
    %1235 = vmatpush1.msra.mxu0 %v1192
    %1236 = vmatprep.subr.mxu0 %v1191
    %1237 = vmatpush1.msra.mxu0 %v1190
    %1238 = vmatprep.subr.mxu0 %v1189
    %1239 = vmatpush1.msra.mxu0 %v1188
    %1240 = vmatprep.subr.mxu0 %v1187
    %1241 = vmatpush1.msra.mxu0 %v1186
    %1242 = vmatprep.subr.mxu0 %v1185
    %1243 = vmatpush1.msra.mxu0 %v1184
    %1244 = vmatprep.subr.mxu0 %v1183
    %1245 = vmatpush1.msra.mxu0 %v1182
    %1246 = vmatprep.subr.mxu0 %v1181
    %1247 = vmatpush1.msra.mxu0 %v1180
    %1248 = vmatprep.subr.mxu0 %v1179
    %1249 = vmatpush1.msra.mxu0 %v1178
    %1250 = vmatprep.subr.mxu0 %v1177
    %1251 = vmatpush1.msra.mxu0 %v1176
    %1252 = vmatprep.subr.mxu0 %v1175
    %1253 = vmatpush1.msra.mxu0 %v1174
    %1254 = vmatprep.subr.mxu0 %v1173
    %1255 = vmatpush1.msra.mxu0 %v1172
    %1256 = vmatprep.subr.mxu0 %v1171
    %1257 = vmatpush1.msra.mxu0 %v1170
    %1258 = vmatprep.subr.mxu0 %v1169
    %1259 = vmatpush1.msra.mxu0 %v1168
    %1260 = vmatprep.subr.mxu0 %v1167
    %1261 = vmatpush1.msra.mxu0 %v1166
    %1262 = vmatprep.subr.mxu0 %v1229
    %1263 = vmatpush2.msra.mxu0 %v1228
    %1264 = vmatprep.subr.mxu0 %v1227
    %1265 = vmatpush2.msra.mxu0 %v1226
    %1266 = vmatprep.subr.mxu0 %v1225
    %1267 = vmatpush2.msra.mxu0 %v1224
    %1268 = vmatprep.subr.mxu0 %v1223
    %1269 = vmatpush2.msra.mxu0 %v1222
    %1270 = vmatprep.subr.mxu0 %v1221
    %1271 = vmatpush2.msra.mxu0 %v1220
    %1272 = vmatprep.subr.mxu0 %v1219
    %1273 = vmatpush2.msra.mxu0 %v1218
    %1274 = vmatprep.subr.mxu0 %v1217
    %1275 = vmatpush2.msra.mxu0 %v1216
    %1276 = vmatprep.subr.mxu0 %v1215
    %1277 = vmatpush2.msra.mxu0 %v1214
    %1278 = vmatprep.subr.mxu0 %v1213
    %1279 = vmatpush2.msra.mxu0 %v1212
    %1280 = vmatprep.subr.mxu0 %v1211
    %1281 = vmatpush2.msra.mxu0 %v1210
    %1282 = vmatprep.subr.mxu0 %v1209
    %1283 = vmatpush2.msra.mxu0 %v1208
    %1284 = vmatprep.subr.mxu0 %v1207
    %1285 = vmatpush2.msra.mxu0 %v1206
    %1286 = vmatprep.subr.mxu0 %v1205
    %1287 = vmatpush2.msra.mxu0 %v1204
    %1288 = vmatprep.subr.mxu0 %v1203
    %1289 = vmatpush2.msra.mxu0 %v1202
    %1290 = vmatprep.subr.mxu0 %v1201
    %1291 = vmatpush2.msra.mxu0 %v1200
    %1292 = vmatprep.subr.mxu0 %v1199
    %1293 = vmatpush2.msra.mxu0 %v1198
    %1294 = vmatprep.mubr.f32.mxu0 %v1164
    %1295 = vmatmul.mubr.f32.gmra.mxu0 %v1163
    %v1296 = vpop.f32.mrf.mxu0
    %v1297 = vpop.f32.mrf.mxu0
    %v1298 = vadd.f32 0.0, %v1297
    %1299 = vdwg.mxu0
    %vm1300 = vcmask 7168
    %v1301 = vsel %vm1300, %v280, %v572
    %vm1302 = vcmask 15360
    %v1303 = vsel %vm1302, %v1301, %v865
    %vm1304 = vcmask 23552
    %v1305 = vsel %vm1304, %v1303, %v1158
    %vm1306 = vcmask 25600
    %1307 = vst.msk [vmem:[#allocation2] sm:$0x3] %vm1306, %v1305
    %1309 = vrot.lane.b32.xlu0 %v713, 32
    %v1310 = vpop.permute.xlu0 %1309
    %1313 = vrot.lane.b32.xlu0 %v1006, 64
    %v1314 = vpop.permute.xlu0 %1313
    %1317 = vrot.lane.b32.xlu0 %v1298, 96
    %v1318 = vpop.permute.xlu0 %1317
    %v1320 = vsel %vm40, %v420, %v1310
    %vm1321 = vcmask 523264
    %v1322 = vsel %vm1321, %v1320, %v1314
    %vm1323 = vcmask 785408
    %v1324 = vsel %vm1323, %v1322, %v1318
    %1325 = vst [vmem:[%s7] sm:$0x3] %v1324
    // Predicated region
    $region26: #{musiclm_text_conditioning.1} parent=1 // pred_check
      _
    $region27: #{musiclm_text_conditioning.1} parent=1 // pred_check_branch
      %1327 = sbr.rel (0) target = $region29
    $region28: #{musiclm_text_conditioning.1} parent=1 // pred_region
      %s1329 = ssub.s32 32, 32
      %1330 = vsyncadd [#allocation3], %s1329
      %s1332 = sshll.u32 [#allocation2], 4
      %s1333 = int_to_ptr.vmem [resolvable:$true] %s1332
      %1335 = dma.vmem_to_hbm [thread:$0]  %s1333, 32, %s6, [#allocation3]
    $region29: #{musiclm_text_conditioning.1} parent=1 // pred_fallthru
      _
    // Predicated region
    $region30: #{musiclm_text_conditioning.1} parent=1 // pred_check
      _
    $region31: #{musiclm_text_conditioning.1} parent=1 // pred_check_branch
      %1337 = sbr.rel (0) target = $region33
    $region32: #{musiclm_text_conditioning.1} parent=1 // pred_region
      _
    $region33: #{musiclm_text_conditioning.1} parent=1 // pred_fallthru
      _
    // Predicated region
    $region34: #{musiclm_text_conditioning.1} parent=1 // pred_check
      _
    $region35: #{musiclm_text_conditioning.1} parent=1 // pred_check_branch
      %1339 = sbr.rel (0) target = $region37
    $region36: #{musiclm_text_conditioning.1} parent=1 // pred_region
      %s1341 = ssub.s32 32, 32
      %1342 = vsyncadd [#allocation5], %s1341
      %s1344 = sshll.u32 [#allocation4], 4
      %s1345 = int_to_ptr.vmem [resolvable:$true] %s1344
      %1347 = dma.vmem_to_hbm [thread:$0]  %s1345, 32, %s8, [#allocation5]
    $region37: #{musiclm_text_conditioning.1} parent=1 // pred_fallthru
      _
    // Predicated region
    $region38: #{musiclm_text_conditioning.1} parent=1 // pred_check
      _
    $region39: #{musiclm_text_conditioning.1} parent=1 // pred_check_branch
      %1349 = sbr.rel (0) target = $region41
    $region40: #{musiclm_text_conditioning.1} parent=1 // pred_region
      %1350 = dma.done [#allocation3], 32
    $region41: #{musiclm_text_conditioning.1} parent=1 // pred_fallthru
      _
    // Predicated region
    $region42: #{musiclm_text_conditioning.1} parent=1 // pred_check
      _
    $region43: #{musiclm_text_conditioning.1} parent=1 // pred_check_branch
      %1352 = sbr.rel (0) target = $region45
    $region44: #{musiclm_text_conditioning.1} parent=1 // pred_region
      _
    $region45: #{musiclm_text_conditioning.1} parent=1 // pred_fallthru
      _
    // Predicated region
    $region46: #{musiclm_text_conditioning.1} parent=1 // pred_check
      _
    $region47: #{musiclm_text_conditioning.1} parent=1 // pred_check_branch
      %1354 = sbr.rel (0) target = $region49
    $region48: #{musiclm_text_conditioning.1} parent=1 // pred_region
      %1355 = dma.done [#allocation5], 32
    $region49: #{musiclm_text_conditioning.1} parent=1 // pred_fallthru
      _
    %1356 = vsyncpa [#allocation3], 1
    %1357 = vsyncpa [#allocation5], 1

</llo_original>
